<compile_context>
chip_gen: v7x
topology: tpu7x:2x2x1
jax: 0.10.0
libtpu: 0.0.40
codegen_flags: <defaults>
</compile_context>

<pallas_src>
import functools

import jax
import jax.numpy as jnp
import numpy as np
from jax.experimental import pallas as pl
from jax.experimental.pallas import tpu as pltpu

GEN_EPS = 1e-7          # GENConv eps
NEG_BIAS_VAL = -1e30    # additive softmax bias for non-edges
NUM_BOND = 4            # real bond types
IND_CH = NUM_BOND       # padded one-hot channel carrying the "no edge" flag
# rows of the coalesced per-layer vector block
ROW_PSCALE, ROW_PSHIFT, ROW_BIAS, ROW_FSCALE, ROW_FSHIFT = 0, 1, 2, 3, 4


# --------------------------------------------------------------------------
# Kernel: grid = (layer, target-node tile).  The node state h and the
# per-layer aggregated messages live in VMEM scratch across the whole grid.
# Per-layer parameters are indexed by the layer axis (one DMA per layer);
# constant-index inputs (h0, pool) are DMA'd once.
# --------------------------------------------------------------------------
def deepergcn_kernel(h0_ref, oh_ref, pool_ref, t_ref, vecs_ref, btab_ref,
                     w_ref, out_ref, h_scr, agg_scr):
    l = pl.program_id(0)
    it = pl.program_id(1)
    num_layers = pl.num_programs(0)
    num_itiles = pl.num_programs(1)

    N, D = h_scr.shape
    TIN, BP = oh_ref.shape
    TI = TIN // N                                           # target rows per tile

    @pl.when((l == 0) & (it == 0))
    def _init():
        h_scr[...] = h0_ref[...]

    h = h_scr[...]                                          # [N, D] f32
    vec = vecs_ref[0]                                       # [8, D] f32
    pscale = vec[ROW_PSCALE:ROW_PSCALE + 1]                 # [1, D]
    pshift = vec[ROW_PSHIFT:ROW_PSHIFT + 1]

    # pre-activation BatchNorm(eval) + ReLU; layer 0 consumes the raw embedding
    x = jnp.where(l == 0, h, jnp.maximum(h * pscale + pshift, 0.0))   # [N, D]

    # ---- GENConv messages for target rows [it*TI, (it+1)*TI) -------------
    # Rebuild this layer's edge embeddings from the bf16 bond one-hot with a
    # small MXU matmul (padded btab rows are zero, so the "no edge" channel
    # does not leak into e).
    oh = oh_ref[...]                                        # [TI*N, BP] bf16
    e = jnp.dot(oh, btab_ref[0],
                preferred_element_type=jnp.float32)         # [TI*N, D] f32
    e = e.reshape(TI, N, D)

    # additive softmax mask derived from the indicator channel (no separate
    # lane-padded [N, N, 1] bias input / DMA stream)
    bias = oh[:, IND_CH:IND_CH + 1].astype(jnp.float32).reshape(TI, N, 1)
    bias = bias * NEG_BIAS_VAL                              # 0 on edges, -1e30 off

    t = t_ref[l]                                            # SMEM scalar (t > 0)
    # Fused message/logit chain: on edges bias == 0 so logits == msg * t, and
    # off-edge wexp underflows to exactly 0, hence
    #   sum_j wexp * logits == t * sum_j wexp * msg.
    # Keeps a single [TI, N, D] live chain (no separate msg tensor).
    logits = (jnp.maximum(x[None, :, :] + e, 0.0) + GEN_EPS) * t + bias
    mx = jnp.max(logits, axis=1, keepdims=True)             # [TI, 1, D]
    wexp = jnp.exp(logits - mx)                             # [TI, N, D]
    denom = jnp.sum(wexp, axis=1) + 1e-16                   # [TI, D]
    num = jnp.sum(wexp * logits, axis=1)                    # [TI, D]
    agg_rows = num / (denom * t)                            # exact divide, tiny
    # NOTE: a target row with no incident edge degenerates the same way the
    # dense reference does (never exercised by the demo's ring graphs).

    row0 = pl.multiple_of(it * TI, TI)
    agg_scr[pl.ds(row0, TI), :] = agg_rows

    # ---- Linear + res+ update once every target tile of this layer is done -
    @pl.when(it == num_itiles - 1)
    def _update():
        lin_b = vec[ROW_BIAS:ROW_BIAS + 1]                  # [1, D]
        conv_in = (agg_scr[...] + x).astype(jnp.bfloat16)   # bf16 MXU operand
        conv_out = jnp.dot(conv_in, w_ref[0],
                           preferred_element_type=jnp.float32) + lin_b
        h_scr[...] = jnp.where(l == 0, conv_out, conv_out + h)

    # ---- final BatchNorm + global mean pool on the very last grid step -----
    @pl.when((l == num_layers - 1) & (it == num_itiles - 1))
    def _finalize():
        fscale = vec[ROW_FSCALE:ROW_FSCALE + 1]
        fshift = vec[ROW_FSHIFT:ROW_FSHIFT + 1]
        hf = h_scr[...] * fscale + fshift                   # [N, D]
        out_ref[...] = jnp.dot(pool_ref[...], hf.astype(jnp.bfloat16),
                               preferred_element_type=jnp.float32)


def _padded_bytes(shape, itemsize):
    """VMEM footprint of a block after (8,128) tiling of the minor dims."""
    s = list(shape)
    if len(s) >= 2:
        s[-2] = -(-s[-2] // 8) * 8
    s[-1] = -(-s[-1] // 128) * 128
    return int(np.prod(s)) * itemsize


def _vmem_limit_bytes(est):
    # Generation-aware cap: leave headroom below physical VMEM (64 MiB/core on
    # v7x, 128 MiB on v5e/v6e).  Falls back to the smallest part if the query
    # is unavailable (e.g. interpret mode).
    try:
        phys = int(pltpu.get_tpu_info().vmem_capacity_bytes)
    except Exception:
        phys = 64 << 20
    return int(min((phys * 3) // 4, max(16 << 20, est)))


@functools.partial(jax.jit, static_argnames=("ti",))
def deepergcn_forward(h0, onehot2d, pool, t, vecs, btab, W, *, ti=8):
    N, D = h0.shape
    L = W.shape[0]
    G = pool.shape[0]
    BP = onehot2d.shape[1]
    assert N % ti == 0 and onehot2d.shape[0] == N * N
    ni = N // ti

    grid_spec = pltpu.PrefetchScalarGridSpec(
        num_scalar_prefetch=0,
        grid=(L, ni),                                          # layer outer, i-tile inner
        in_specs=[
            pl.BlockSpec((N, D), lambda l, i: (0, 0)),         # h0 (constant block)
            pl.BlockSpec((ti * N, BP), lambda l, i: (i, 0)),   # packed bond one-hot rows
            pl.BlockSpec((G, N), lambda l, i: (0, 0)),         # pooling matrix
            pl.BlockSpec(memory_space=pltpu.MemorySpace.SMEM), # temperatures t
            pl.BlockSpec((1, 8, D), lambda l, i: (l, 0, 0)),   # coalesced per-layer vectors
            pl.BlockSpec((1, BP, D), lambda l, i: (l, 0, 0)),  # bond embedding table
            pl.BlockSpec((1, D, D), lambda l, i: (l, 0, 0)),   # MLP weight
        ],
        out_specs=pl.BlockSpec((G, D), lambda l, i: (0, 0)),
        scratch_shapes=[pltpu.VMEM((N, D), jnp.float32),       # resident node state h
                        pltpu.VMEM((N, D), jnp.float32)],      # per-layer agg rows
    )

    # VMEM budget: double-buffered blocks + scratch + in-flight [ti, N, D]
    # temporaries + headroom.  TODO(synk): single-buffer the constant-index
    # blocks (pipeline_mode=pl.Buffered(1)) once that path is relied upon.
    est = 2 * (_padded_bytes((N, D), 4) + _padded_bytes((ti * N, BP), 2)
               + _padded_bytes((G, N), 2) + _padded_bytes((1, 8, D), 4)
               + _padded_bytes((1, BP, D), 2) + _padded_bytes((1, D, D), 2)
               + _padded_bytes((G, D), 4))
    est += 2 * _padded_bytes((N, D), 4)            # h / agg scratch
    est += 6 * _padded_bytes((ti, N, D), 4)        # softmax-chain temporaries
    est += 8 << 20                                 # headroom

    return pl.pallas_call(
        deepergcn_kernel,
        out_shape=jax.ShapeDtypeStruct((G, D), jnp.float32),
        grid_spec=grid_spec,
        compiler_params=pltpu.CompilerParams(
            # The layer axis carries the residual state and the i-tiles share
            # agg_scr -> both sequential here.
            # TODO(synk): split i-tiles across v7x's two TensorCores
            # (core_map + per-layer barrier) and use a bounded-degree gather
            # instead of the dense source axis at production N.
            dimension_semantics=("arbitrary", "arbitrary"),
            vmem_limit_bytes=_vmem_limit_bytes(est)),
    )(h0, onehot2d, pool, t, vecs, btab, W)


# --------------------------------------------------------------------------
# Pure-JAX reference with the SAME dtype policy (bf16 MXU operands, f32
# accumulation) so the check isolates kernel plumbing rather than matmul
# emulation differences.
# --------------------------------------------------------------------------
def reference_forward(h0, onehot2d, pool, t, vecs, btab, W):
    N, D = h0.shape
    L = W.shape[0]
    bias = onehot2d[:, IND_CH].astype(jnp.float32).reshape(N, N, 1) * NEG_BIAS_VAL
    h = h0
    for l in range(L):
        x = h if l == 0 else jnp.maximum(
            h * vecs[l, ROW_PSCALE] + vecs[l, ROW_PSHIFT], 0.0)
        e = jnp.dot(onehot2d, btab[l],
                    preferred_element_type=jnp.float32).reshape(N, N, D)
        msg = jnp.maximum(x[None, :, :] + e, 0.0) + GEN_EPS
        logits = msg * t[l] + bias
        mx = jnp.max(logits, axis=1, keepdims=True)
        wexp = jnp.exp(logits - mx)
        denom = jnp.sum(wexp, axis=1) + 1e-16
        agg = jnp.sum(wexp * msg, axis=1) / denom
        conv_in = (agg + x).astype(jnp.bfloat16)
        conv_out = jnp.dot(conv_in, W[l],
                           preferred_element_type=jnp.float32) + vecs[l, ROW_BIAS]
        h = conv_out if l == 0 else conv_out + h
    hf = h * vecs[-1, ROW_FSCALE] + vecs[-1, ROW_FSHIFT]
    return jnp.dot(pool, hf.astype(jnp.bfloat16),
                   preferred_element_type=jnp.float32)


if __name__ == "__main__":
    # Small shapes consistent with the module (hidden shrunk 512 -> 128)
    L = 14            # num_layers=14 as in load_DeeperGCN
    D = 128           # hidden_channels (512 in the real module)
    G = 2             # graphs in the batch
    NPG = 8           # nodes per graph
    N = G * NPG       # total nodes
    NUM_ATOM = 10
    BPAD = 8          # one-hot padded to a sublane multiple; ch. IND_CH = "no edge"

    key = jax.random.PRNGKey(0)
    keys = jax.random.split(key, 8)

    # ---- synthetic molecular-graph batch (ring per graph, bidirectional) ---
    atom_type = jax.random.randint(keys[0], (N,), 0, NUM_ATOM)
    src_list, dst_list = [], []
    for g in range(G):
        base = g * NPG
        for i in range(NPG):
            j = (i + 1) % NPG
            src_list += [base + i, base + j]
            dst_list += [base + j, base + i]
    src = np.array(src_list)
    dst = np.array(dst_list)
    bond_type_e = np.asarray(
        jax.random.randint(keys[1], (len(src),), 0, NUM_BOND))

    # Packed [N*N, BPAD] bond one-hot; channel IND_CH marks "no edge".
    oh_np = np.zeros((N, N, BPAD), dtype=np.float32)
    oh_np[:, :, IND_CH] = 1.0
    oh_np[dst, src, IND_CH] = 0.0
    oh_np[dst, src, bond_type_e] = 1.0
    onehot2d = jnp.asarray(oh_np.reshape(N * N, BPAD), dtype=jnp.bfloat16)

    # ---- deterministic parameters (fresh init, eval mode) ------------------
    atom_table = 0.25 * jax.random.normal(keys[2], (NUM_ATOM, D), jnp.float32)
    bond_tables = 0.1 * jax.random.normal(keys[3], (L, NUM_BOND, D), jnp.float32)
    btab = jnp.concatenate(
        [bond_tables, jnp.zeros((L, BPAD - NUM_BOND, D), jnp.float32)],
        axis=1).astype(jnp.bfloat16)                                  # [L, BPAD, D]
    W = ((0.5 / np.sqrt(D)) *
         jax.random.normal(keys[4], (L, D, D), jnp.float32)).astype(jnp.bfloat16)
    bvec = 0.01 * jax.random.normal(keys[5], (L, D), jnp.float32)
    gamma = 1.0 + 0.01 * jax.random.normal(keys[6], (L, D), jnp.float32)
    beta = 0.01 * jax.random.normal(keys[7], (L, D), jnp.float32)
    t = jnp.ones((L,), jnp.float32)   # learn_t temperature, init 1.0 (kept > 0)

    # BatchNorm in eval mode with running_mean=0, running_var=1
    bn_scale = gamma / jnp.sqrt(1.0 + 1e-5)                   # [L, D]
    bn_shift = beta
    # pre-norm of layer l is norms[l-1]; layer 0 has none (identity rows)
    pscale = jnp.concatenate([jnp.ones((1, D)), bn_scale[:-1]], 0)
    pshift = jnp.concatenate([jnp.zeros((1, D)), bn_shift[:-1]], 0)

    # Coalesced per-layer vectors: one (1, 8, D) block instead of five
    # sublane-padded DMA streams.
    vecs_np = np.zeros((L, 8, D), dtype=np.float32)
    vecs_np[:, ROW_PSCALE, :] = np.asarray(pscale)
    vecs_np[:, ROW_PSHIFT, :] = np.asarray(pshift)
    vecs_np[:, ROW_BIAS, :] = np.asarray(bvec)
    vecs_np[:, ROW_FSCALE, :] = np.asarray(bn_scale[-1])
    vecs_np[:, ROW_FSHIFT, :] = np.asarray(bn_shift[-1])
    vecs = jnp.asarray(vecs_np)

    # glue: AtomEncoder embedding lookup (host-side gather)
    h0 = jnp.take(atom_table, atom_type, axis=0)              # [N, D] f32

    # global mean pool matrix [G, N] (1/NPG is exact in bf16)
    pool_np = np.zeros((G, N), dtype=np.float32)
    for g in range(G):
        pool_np[g, g * NPG:(g + 1) * NPG] = 1.0 / NPG
    pool = jnp.asarray(pool_np, dtype=jnp.bfloat16)

    # TODO(synk): CGIP_G.graph_pred_linear is None in __init__ (set externally
    # in the original pipeline) -> identity here; Dropout(0.5) is identity in
    # eval mode; from_pretrained checkpoint IO has no kernel equivalent.
    out = deepergcn_forward(h0, onehot2d, pool, t, vecs, btab, W, ti=8)
    out = jax.block_until_ready(out)

    ref = reference_forward(h0, onehot2d, pool, t, vecs, btab, W)
    assert out.shape == (G, D)
    assert bool(jnp.all(jnp.isfinite(out)))
    np.testing.assert_allclose(np.asarray(out), np.asarray(ref),
                               rtol=2e-2, atol=2e-2)
    print("KERNEL_OK")
</pallas_src>

<mosaic_0001>
module attributes {stable_mosaic.version = 11 : i64} {
  func.func @deepergcn_kernel(%arg0: i32, %arg1: i32, %arg2: memref<16x128xf32, #tpu.memory_space<vmem>>, %arg3: memref<128x8xbf16, #tpu.memory_space<vmem>>, %arg4: memref<2x16xbf16, #tpu.memory_space<vmem>>, %arg5: memref<14xf32, #tpu.memory_space<smem>>, %arg6: memref<1x8x128xf32, #tpu.memory_space<vmem>>, %arg7: memref<1x8x128xbf16, #tpu.memory_space<vmem>>, %arg8: memref<1x128x128xbf16, #tpu.memory_space<vmem>>, %arg9: memref<2x128xf32, #tpu.memory_space<vmem>>, %arg10: memref<16x128xf32, #tpu.memory_space<vmem>>, %arg11: memref<16x128xf32, #tpu.memory_space<vmem>>) attributes {dimension_semantics = [#tpu.dimension_semantics<arbitrary>, #tpu.dimension_semantics<arbitrary>], iteration_bounds = array<i64: 14, 2>, scalar_prefetch = 0 : i64, scratch_operands = 2 : i64, tpu.core_type = #tpu.core_type<tc>, window_params = [{pipeline_mode = #tpu.pipeline_mode<synchronous>, transform_indices = @transform_0, window_bounds = array<i64: 16, 128>}, {transform_indices = @transform_1, window_bounds = array<i64: 128, 8>}, {pipeline_mode = #tpu.pipeline_mode<synchronous>, transform_indices = @transform_2, window_bounds = array<i64: 2, 16>}, {transform_indices = @transform_3, window_bounds = array<i64: 14>}, {transform_indices = @transform_4, window_bounds = array<i64: 1, 8, 128>}, {transform_indices = @transform_5, window_bounds = array<i64: 1, 8, 128>}, {transform_indices = @transform_6, window_bounds = array<i64: 1, 128, 128>}, {pipeline_mode = #tpu.pipeline_mode<synchronous>, transform_indices = @transform_7, window_bounds = array<i64: 2, 128>}]} {
    %c0_i32 = arith.constant 0 : i32
    %0 = arith.cmpi eq, %arg0, %c0_i32 : i32
    %c0_i32_0 = arith.constant 0 : i32
    %1 = arith.cmpi eq, %arg1, %c0_i32_0 : i32
    %2 = arith.andi %0, %1 : i1
    %3 = arith.extui %2 : i1 to i32
    %c0_i32_1 = arith.constant 0 : i32
    %4 = arith.cmpi ne, %3, %c0_i32_1 : i32
    scf.if %4 {
      %c0_24 = arith.constant 0 : index
      %c0_25 = arith.constant 0 : index
      %66 = vector.load %arg2[%c0_24, %c0_25] : memref<16x128xf32, #tpu.memory_space<vmem>>, vector<16x128xf32>
      %c0_26 = arith.constant 0 : index
      %c0_27 = arith.constant 0 : index
      %67 = vector.load %arg10[%c0_26, %c0_27] : memref<16x128xf32, #tpu.memory_space<vmem>>, vector<16x128xf32>
      tpu.vector_store %arg10[%c0_26, %c0_27], %66 {strides = array<i32>} : memref<16x128xf32, #tpu.memory_space<vmem>>, vector<16x128xf32>,
    } else {
    }
    %c0 = arith.constant 0 : index
    %c0_2 = arith.constant 0 : index
    %5 = vector.load %arg10[%c0, %c0_2] : memref<16x128xf32, #tpu.memory_space<vmem>>, vector<16x128xf32>
    %c0_3 = arith.constant 0 : index
    %c0_4 = arith.constant 0 : index
    %c0_5 = arith.constant 0 : index
    %6 = vector.load %arg6[%c0_3, %c0_4, %c0_5] : memref<1x8x128xf32, #tpu.memory_space<vmem>>, vector<1x8x128xf32>
    %7 = vector.shape_cast %6 : vector<1x8x128xf32> to vector<8x128xf32>
    %8 = vector.extract_strided_slice %7 {offsets = [0, 0], sizes = [1, 128], strides = [1, 1]} : vector<8x128xf32> to vector<1x128xf32>
    %9 = vector.extract_strided_slice %7 {offsets = [1, 0], sizes = [1, 128], strides = [1, 1]} : vector<8x128xf32> to vector<1x128xf32>
    %c0_i32_6 = arith.constant 0 : i32
    %10 = arith.cmpi eq, %arg0, %c0_i32_6 : i32
    %11 = vector.broadcast %8 : vector<1x128xf32> to vector<16x128xf32>
    %12 = arith.mulf %5, %11 : vector<16x128xf32>
    %13 = vector.broadcast %9 : vector<1x128xf32> to vector<16x128xf32>
    %14 = arith.addf %12, %13 : vector<16x128xf32>
    %cst = arith.constant 0.000000e+00 : f32
    %15 = vector.broadcast %cst : f32 to vector<16x128xf32>
    %16 = arith.maximumf %14, %15 : vector<16x128xf32>
    %17 = arith.select %10, %5, %16 : vector<16x128xf32>
    %c0_7 = arith.constant 0 : index
    %c0_8 = arith.constant 0 : index
    %18 = vector.load %arg3[%c0_7, %c0_8] : memref<128x8xbf16, #tpu.memory_space<vmem>>, vector<128x8xbf16>
    %c0_9 = arith.constant 0 : index
    %c0_10 = arith.constant 0 : index
    %c0_11 = arith.constant 0 : index
    %19 = vector.load %arg7[%c0_9, %c0_10, %c0_11] : memref<1x8x128xbf16, #tpu.memory_space<vmem>>, vector<1x8x128xbf16>
    %20 = vector.shape_cast %19 : vector<1x8x128xbf16> to vector<8x128xbf16>
    %cst_12 = arith.constant dense<0.000000e+00> : vector<128x128xf32>
    %21 = tpu.matmul %18, %20, %cst_12 {dimension_numbers = #tpu.dot_dimension_numbers<[1], [0], [0], [1], [0, 0, 1, 1], [], []>} : vector<128x8xbf16>, vector<8x128xbf16>, vector<128x128xf32> -> vector<128x128xf32>
    %22 = vector.shape_cast %21 : vector<128x128xf32> to vector<8x16x128xf32>
    %23 = vector.extract_strided_slice %18 {offsets = [0, 4], sizes = [128, 1], strides = [1, 1]} : vector<128x8xbf16> to vector<128x1xbf16>
    %24 = arith.extf %23 : vector<128x1xbf16> to vector<128x1xf32>
    %25 = vector.shape_cast %24 : vector<128x1xf32> to vector<8x16x1xf32>
    %cst_13 = arith.constant -1.000000e+30 : f32
    %26 = vector.broadcast %cst_13 : f32 to vector<8x16x1xf32>
    %27 = arith.mulf %25, %26 : vector<8x16x1xf32>
    %28 = arith.index_cast %arg0 : i32 to index
    %29 = memref.load %arg5[%28] : memref<14xf32, #tpu.memory_space<smem>>
    %30 = vector.shape_cast %17 : vector<16x128xf32> to vector<1x16x128xf32>
    %31 = vector.broadcast %30 : vector<1x16x128xf32> to vector<8x16x128xf32>
    %32 = arith.addf %31, %22 : vector<8x16x128xf32>
    %cst_14 = arith.constant 0.000000e+00 : f32
    %33 = vector.broadcast %cst_14 : f32 to vector<8x16x128xf32>
    %34 = arith.maximumf %32, %33 : vector<8x16x128xf32>
    %cst_15 = arith.constant 1.000000e-07 : f32
    %35 = vector.broadcast %cst_15 : f32 to vector<8x16x128xf32>
    %36 = arith.addf %34, %35 : vector<8x16x128xf32>
    %37 = vector.broadcast %29 : f32 to vector<8x16x128xf32>
    %38 = arith.mulf %36, %37 : vector<8x16x128xf32>
    %39 = vector.broadcast %27 : vector<8x16x1xf32> to vector<8x16x128xf32>
    %40 = arith.addf %38, %39 : vector<8x16x128xf32>
    %cst_16 = arith.constant dense<0xFF800000> : vector<8x128xf32>
    %41 = vector.multi_reduction <maximumf>, %40, %cst_16 [1] : vector<8x16x128xf32> to vector<8x128xf32>
    %42 = vector.shape_cast %41 : vector<8x128xf32> to vector<8x1x128xf32>
    %43 = vector.broadcast %42 : vector<8x1x128xf32> to vector<8x16x128xf32>
    %44 = arith.subf %40, %43 : vector<8x16x128xf32>
    %45 = math.exp %44 : vector<8x16x128xf32>
    %cst_17 = arith.constant dense<0.000000e+00> : vector<8x128xf32>
    %46 = vector.multi_reduction <add>, %45, %cst_17 [1] : vector<8x16x128xf32> to vector<8x128xf32>
    %cst_18 = arith.constant 1.000000e-16 : f32
    %47 = vector.broadcast %cst_18 : f32 to vector<8x128xf32>
    %48 = arith.addf %46, %47 : vector<8x128xf32>
    %49 = arith.mulf %45, %40 : vector<8x16x128xf32>
    %cst_19 = arith.constant dense<0.000000e+00> : vector<8x128xf32>
    %50 = vector.multi_reduction <add>, %49, %cst_19 [1] : vector<8x16x128xf32> to vector<8x128xf32>
    %51 = vector.broadcast %29 : f32 to vector<8x128xf32>
    %52 = arith.mulf %48, %51 : vector<8x128xf32>
    %53 = arith.divf %50, %52 : vector<8x128xf32>
    %c8_i32 = arith.constant 8 : i32
    %54 = arith.muli %arg1, %c8_i32 : i32
    %55 = tpu.assume_multiple %54, 8 : i32
    %56 = arith.index_cast %55 : i32 to index
    %c0_20 = arith.constant 0 : index
    %57 = vector.load %arg11[%56, %c0_20] : memref<16x128xf32, #tpu.memory_space<vmem>>, vector<8x128xf32>
    tpu.vector_store %arg11[%56, %c0_20], %53 {strides = array<i32>} : memref<16x128xf32, #tpu.memory_space<vmem>>, vector<8x128xf32>,
    %c1_i32 = arith.constant 1 : i32
    %58 = arith.cmpi eq, %arg1, %c1_i32 : i32
    %59 = arith.extui %58 : i1 to i32
    %c0_i32_21 = arith.constant 0 : i32
    %60 = arith.cmpi ne, %59, %c0_i32_21 : i32
    scf.if %60 {
      %66 = vector.extract_strided_slice %7 {offsets = [2, 0], sizes = [1, 128], strides = [1, 1]} : vector<8x128xf32> to vector<1x128xf32>
      %c0_24 = arith.constant 0 : index
      %c0_25 = arith.constant 0 : index
      %67 = vector.load %arg11[%c0_24, %c0_25] : memref<16x128xf32, #tpu.memory_space<vmem>>, vector<16x128xf32>
      %68 = arith.addf %67, %17 : vector<16x128xf32>
      %69 = arith.truncf %68 : vector<16x128xf32> to vector<16x128xbf16>
      %c0_26 = arith.constant 0 : index
      %c0_27 = arith.constant 0 : index
      %c0_28 = arith.constant 0 : index
      %70 = vector.load %arg8[%c0_26, %c0_27, %c0_28] : memref<1x128x128xbf16, #tpu.memory_space<vmem>>, vector<1x128x128xbf16>
      %71 = vector.shape_cast %70 : vector<1x128x128xbf16> to vector<128x128xbf16>
      %cst_29 = arith.constant dense<0.000000e+00> : vector<16x128xf32>
      %72 = tpu.matmul %69, %71, %cst_29 {dimension_numbers = #tpu.dot_dimension_numbers<[1], [0], [0], [1], [0, 0, 1, 1], [], []>} : vector<16x128xbf16>, vector<128x128xbf16>, vector<16x128xf32> -> vector<16x128xf32>
      %73 = vector.broadcast %66 : vector<1x128xf32> to vector<16x128xf32>
      %74 = arith.addf %72, %73 : vector<16x128xf32>
      %c0_i32_30 = arith.constant 0 : i32
      %75 = arith.cmpi eq, %arg0, %c0_i32_30 : i32
      %76 = arith.addf %74, %5 : vector<16x128xf32>
      %77 = arith.select %75, %74, %76 : vector<16x128xf32>
      %c0_31 = arith.constant 0 : index
      %c0_32 = arith.constant 0 : index
      %78 = vector.load %arg10[%c0_31, %c0_32] : memref<16x128xf32, #tpu.memory_space<vmem>>, vector<16x128xf32>
      tpu.vector_store %arg10[%c0_31, %c0_32], %77 {strides = array<i32>} : memref<16x128xf32, #tpu.memory_space<vmem>>, vector<16x128xf32>,
    } else {
    }
    %c13_i32 = arith.constant 13 : i32
    %61 = arith.cmpi eq, %arg0, %c13_i32 : i32
    %c1_i32_22 = arith.constant 1 : i32
    %62 = arith.cmpi eq, %arg1, %c1_i32_22 : i32
    %63 = arith.andi %61, %62 : i1
    %64 = arith.extui %63 : i1 to i32
    %c0_i32_23 = arith.constant 0 : i32
    %65 = arith.cmpi ne, %64, %c0_i32_23 : i32
    scf.if %65 {
      %66 = vector.extract_strided_slice %7 {offsets = [3, 0], sizes = [1, 128], strides = [1, 1]} : vector<8x128xf32> to vector<1x128xf32>
      %67 = vector.extract_strided_slice %7 {offsets = [4, 0], sizes = [1, 128], strides = [1, 1]} : vector<8x128xf32> to vector<1x128xf32>
      %c0_24 = arith.constant 0 : index
      %c0_25 = arith.constant 0 : index
      %68 = vector.load %arg10[%c0_24, %c0_25] : memref<16x128xf32, #tpu.memory_space<vmem>>, vector<16x128xf32>
      %69 = vector.broadcast %66 : vector<1x128xf32> to vector<16x128xf32>
      %70 = arith.mulf %68, %69 : vector<16x128xf32>
      %71 = vector.broadcast %67 : vector<1x128xf32> to vector<16x128xf32>
      %72 = arith.addf %70, %71 : vector<16x128xf32>
      %c0_26 = arith.constant 0 : index
      %c0_27 = arith.constant 0 : index
      %73 = vector.load %arg4[%c0_26, %c0_27] : memref<2x16xbf16, #tpu.memory_space<vmem>>, vector<2x16xbf16>
      %74 = arith.truncf %72 : vector<16x128xf32> to vector<16x128xbf16>
      %cst_28 = arith.constant dense<0.000000e+00> : vector<2x128xf32>
      %75 = tpu.matmul %73, %74, %cst_28 {dimension_numbers = #tpu.dot_dimension_numbers<[1], [0], [0], [1], [0, 0, 1, 1], [], []>} : vector<2x16xbf16>, vector<16x128xbf16>, vector<2x128xf32> -> vector<2x128xf32>
      %c0_29 = arith.constant 0 : index
      %c0_30 = arith.constant 0 : index
      %76 = vector.load %arg9[%c0_29, %c0_30] : memref<2x128xf32, #tpu.memory_space<vmem>>, vector<2x128xf32>
      tpu.vector_store %arg9[%c0_29, %c0_30], %75 {strides = array<i32>} : memref<2x128xf32, #tpu.memory_space<vmem>>, vector<2x128xf32>,
    } else {
    }
    return
  }
  func.func @transform_0(%arg0: i32, %arg1: i32) -> (i32, i32) {
    %c0_i32 = arith.constant 0 : i32
    %c0_i32_0 = arith.constant 0 : i32
    %c0_i32_1 = arith.constant 0 : i32
    return %c0_i32, %c0_i32_0 : i32, i32
  }
  func.func @transform_1(%arg0: i32, %arg1: i32) -> (i32, i32) {
    %c0_i32 = arith.constant 0 : i32
    %c0_i32_0 = arith.constant 0 : i32
    return %arg1, %c0_i32 : i32, i32
  }
  func.func @transform_2(%arg0: i32, %arg1: i32) -> (i32, i32) {
    %c0_i32 = arith.constant 0 : i32
    %c0_i32_0 = arith.constant 0 : i32
    %c0_i32_1 = arith.constant 0 : i32
    return %c0_i32, %c0_i32_0 : i32, i32
  }
  func.func @transform_3(%arg0: i32, %arg1: i32) -> i32 {
    %c0_i32 = arith.constant 0 : i32
    %c0_i32_0 = arith.constant 0 : i32
    return %c0_i32 : i32
  }
  func.func @transform_4(%arg0: i32, %arg1: i32) -> (i32, i32, i32) {
    %c0_i32 = arith.constant 0 : i32
    %c0_i32_0 = arith.constant 0 : i32
    %c0_i32_1 = arith.constant 0 : i32
    return %arg0, %c0_i32, %c0_i32_0 : i32, i32, i32
  }
  func.func @transform_5(%arg0: i32, %arg1: i32) -> (i32, i32, i32) {
    %c0_i32 = arith.constant 0 : i32
    %c0_i32_0 = arith.constant 0 : i32
    %c0_i32_1 = arith.constant 0 : i32
    return %arg0, %c0_i32, %c0_i32_0 : i32, i32, i32
  }
  func.func @transform_6(%arg0: i32, %arg1: i32) -> (i32, i32, i32) {
    %c0_i32 = arith.constant 0 : i32
    %c0_i32_0 = arith.constant 0 : i32
    %c0_i32_1 = arith.constant 0 : i32
    return %arg0, %c0_i32, %c0_i32_0 : i32, i32, i32
  }
  func.func @transform_7(%arg0: i32, %arg1: i32) -> (i32, i32) {
    %c0_i32 = arith.constant 0 : i32
    %c0_i32_0 = arith.constant 0 : i32
    %c0_i32_1 = arith.constant 0 : i32
    return %c0_i32, %c0_i32_0 : i32, i32
  }
}

</mosaic_0001>

<llo_original>
// kernel: deepergcn_forward.1
$region0: #{deepergcn_forward.1}
  #allocation0 [shape = 'u32[]', space=smem, size = 0x4, offset = 0x4, fixed_abs, tag = 'smem constant byte address 0x4 - core index']
  #allocation1 [shape = 'u32[144,128]{1,0:T(1,128)}', space=vmem, size = 0x12000, scoped, tag = 'internal scratch']
  #allocation2 [shape = 'f32[16,128]{1,0:T(8,128)}', space=vmem, size = 0x2000, scoped, tag = 'scratch operand']
  #allocation3 [shape = 'f32[16,128]{1,0:T(8,128)}', space=vmem, size = 0x2000, scoped, tag = 'scratch operand']
  %s0 = inlined_call_operand.vmem [shape: f32[16,128], index: 0, kind: input, shape index: {}]
  %s1 = inlined_call_operand.vmem [shape: bf16[256,8], index: 1, kind: input, shape index: {}]
  %s2 = inlined_call_operand.vmem [shape: bf16[2,16], index: 2, kind: input, shape index: {}]
  %s3 = inlined_call_operand.vmem [shape: f32[14], index: 3, kind: input, shape index: {}]
  %s4 = inlined_call_operand.vmem [shape: f32[14,8,128], index: 4, kind: input, shape index: {}]
  %s5 = inlined_call_operand.hbm [shape: bf16[14,8,128], index: 5, kind: input, shape index: {}]
  %s6 = inlined_call_operand.hbm [shape: bf16[14,128,128], index: 6, kind: input, shape index: {}]
  %s7 = inlined_call_operand.hbm [shape: f32[2,128], index: 7, kind: output, shape index: {}]
  %s8 = sld [smem:[#allocation0]]
  $region85: #{deepergcn_forward.1} parent=0
    _
  %s10 = ssub.s32 1, %s8
  %s11 = scalar_select 0, %s10, %s8
  $region1: #{deepergcn_forward.1} parent=0
    #allocation4 [shape = 'u8[512]{0}', space=smem, size = 0x200, scoped, tag = 'input window, operand 3, single buffered']
    #allocation5 [shape = 's32[2]{0}', space=sflag, size = 0x8, scoped, tag = 'scoped memory for deepergcn_forward.1']
    #allocation6 [shape = 's32[2]{0}', space=sflag, size = 0x8, scoped, tag = 'scoped memory for deepergcn_forward.1']
    #allocation7 [shape = 's32[2]{0}', space=sflag, size = 0x8, scoped, tag = 'scoped memory for deepergcn_forward.1']
    #allocation8 [shape = 'u8[4096]{0}', space=vmem, size = 0x1000, scoped, tag = 'input window, operand 5']
    #allocation9 [shape = 'u8[65536]{0}', space=vmem, size = 0x10000, scoped, tag = 'input window, operand 6']
    #allocation10 [shape = 's32[2]{0}', space=sflag, size = 0x8, scoped, tag = 'scoped memory for deepergcn_forward.1']
    #allocation11 [shape = 'u8[1024]{0}', space=vmem, size = 0x400, scoped, tag = 'output window, operand 0, single buffered']
    %12 = vsyncpa [#allocation7], 0
    %13 = vsyncpa [#allocation5], 0
    %s14 = scalar_lea.sflag [#allocation5], 1
    %15 = vsyncpa %s14, 0
    %16 = vsyncpa [#allocation10], 0
    %s17 = scalar_lea.sflag [#allocation10], 1
    %18 = vsyncpa %s17, 0
    %19 = vsyncpa [#allocation6], 0
    loop: start=0, step=1, limit=30
    $region2: #{deepergcn_forward.1} parent=1 // loop_pre_header
      _
    $region3: #{deepergcn_forward.1} parent=1 // loop_header
      %s21 = sphi 0, %s25
      %p22 = scmp.ge.s32.totalorder %s21, 30
      %s28 = sphi 0, %s40
      %s29 = sphi 0, %s36
      %s30 = sphi 0, %s28
      %s31 = sphi 0, %s29
      %s32 = sphi 0, %s30
      %s33 = sphi 0, %s31
      %s41 = sphi 0, %s41
      %s43 = sphi 0, %s41
      %s44 = sphi 0, %s43
      %s58 = sphi 0, %s44
      %s64 = sphi 0, %s66
      %s67 = sphi 0, %s64
      %s68 = sphi 0, %s67
      %s84 = sphi 0, %s68
      %s88 = sphi 0, %s88
      %s90 = sphi 0, %s88
      %s91 = sphi 0, %s90
      %s105 = sphi 0, %s91
      %s109 = sphi 0, %s109
      %s111 = sphi 0, %s109
      %s112 = sphi 0, %s111
      %s126 = sphi 0, %s112
      %s132 = sphi 0, %s134
      %s135 = sphi 0, %s132
      %s136 = sphi 0, %s135
      %s152 = sphi 0, %s136
      %s158 = sphi 0, %s160
      %s161 = sphi 0, %s158
      %s162 = sphi 0, %s161
      %s178 = sphi 0, %s162
      %s184 = sphi 0, %s186
      %s187 = sphi 0, %s184
      %s188 = sphi 0, %s187
      %s204 = sphi 0, %s188
      %s208 = sphi 0, %s208
      %s210 = sphi 0, %s208
      %s211 = sphi 0, %s210
      %s225 = sphi 0, %s211
    $region4: #{deepergcn_forward.1} parent=1 // loop_header_branch
      %24 = sbr.rel (%p22) target = $region8
    $region5: #{deepergcn_forward.1} parent=1 // loop_body
      %s26 = ssub.s32 %s21, 1
      %s27 = ssub.s32 %s21, 2
      %s34 = sadd.s32 1, %s29
      %p35 = scmp.ge.s32.totalorder %s34, 2
      %s36 = scalar_select %p35, 0, %s34
      %s37 = sadd.s32 1, %s28
      %s38 = scalar_select %p35, %s37, %s28
      %p39 = scmp.ge.s32.totalorder %s38, 14
      %s40 = scalar_select %p39, 0, %s38
      %s42 = sadd.s32 %s41, 1
      %p45 = scmp.eq.s32.totalorder %s21, 27
      %p46 = scmp.ne.s32.totalorder %s41, %s43
      %p47 = scmp.eq.s32.totalorder %s21, 0
      %p48 = por %p46, %p47
      %p49 = scmp.ne.s32.totalorder %s41, %s43
      %p50 = scmp.eq.s32.totalorder %s26, 27
      %p51 = por %p49, %p50
      %p52 = scmp.ne.s32.totalorder %s43, %s44
      %p53 = scmp.eq.s32.totalorder %s26, 0
      %p54 = por %p52, %p53
      %p55 = scmp.ne.s32.totalorder %s43, %s44
      %p56 = scmp.eq.s32.totalorder %s27, 27
      %p57 = por %p55, %p56
      %p59 = scmp.ne.s32.totalorder %s44, %s58
      %p60 = scmp.eq.s32.totalorder %s27, 0
      %p61 = por %p59, %p60
      %s62 = ssub.s32 %s29, %s36
      %p63 = scmp.eq.s32.totalorder %s62, 0
      %s65 = sadd.s32 %s64, 1
      %s66 = scalar_select %p63, %s64, %s65
      %p69 = pneg %p63
      %p70 = scmp.eq.s32.totalorder %s21, 27
      %p71 = por %p69, %p70
      %p72 = scmp.ne.s32.totalorder %s64, %s67
      %p73 = scmp.eq.s32.totalorder %s21, 0
      %p74 = por %p72, %p73
      %p75 = scmp.ne.s32.totalorder %s64, %s67
      %p76 = scmp.eq.s32.totalorder %s26, 27
      %p77 = por %p75, %p76
      %p78 = scmp.ne.s32.totalorder %s67, %s68
      %p79 = scmp.eq.s32.totalorder %s26, 0
      %p80 = por %p78, %p79
      %p81 = scmp.ne.s32.totalorder %s67, %s68
      %p82 = scmp.eq.s32.totalorder %s27, 27
      %p83 = por %p81, %p82
      %p85 = scmp.ne.s32.totalorder %s68, %s84
      %p86 = scmp.eq.s32.totalorder %s27, 0
      %p87 = por %p85, %p86
      %s89 = sadd.s32 %s88, 1
      %p92 = scmp.eq.s32.totalorder %s21, 27
      %p93 = scmp.ne.s32.totalorder %s88, %s90
      %p94 = scmp.eq.s32.totalorder %s21, 0
      %p95 = por %p93, %p94
      %p96 = scmp.ne.s32.totalorder %s88, %s90
      %p97 = scmp.eq.s32.totalorder %s26, 27
      %p98 = por %p96, %p97
      %p99 = scmp.ne.s32.totalorder %s90, %s91
      %p100 = scmp.eq.s32.totalorder %s26, 0
      %p101 = por %p99, %p100
      %p102 = scmp.ne.s32.totalorder %s90, %s91
      %p103 = scmp.eq.s32.totalorder %s27, 27
      %p104 = por %p102, %p103
      %p106 = scmp.ne.s32.totalorder %s91, %s105
      %p107 = scmp.eq.s32.totalorder %s27, 0
      %p108 = por %p106, %p107
      %s110 = sadd.s32 %s109, 1
      %p113 = scmp.eq.s32.totalorder %s21, 27
      %p114 = scmp.ne.s32.totalorder %s109, %s111
      %p115 = scmp.eq.s32.totalorder %s21, 0
      %p116 = por %p114, %p115
      %p117 = scmp.ne.s32.totalorder %s109, %s111
      %p118 = scmp.eq.s32.totalorder %s26, 27
      %p119 = por %p117, %p118
      %p120 = scmp.ne.s32.totalorder %s111, %s112
      %p121 = scmp.eq.s32.totalorder %s26, 0
      %p122 = por %p120, %p121
      %p123 = scmp.ne.s32.totalorder %s111, %s112
      %p124 = scmp.eq.s32.totalorder %s27, 27
      %p125 = por %p123, %p124
      %p127 = scmp.ne.s32.totalorder %s112, %s126
      %p128 = scmp.eq.s32.totalorder %s27, 0
      %p129 = por %p127, %p128
      %s130 = ssub.s32 %s28, %s40
      %p131 = scmp.eq.s32.totalorder %s130, 0
      %s133 = sadd.s32 %s132, 1
      %s134 = scalar_select %p131, %s132, %s133
      %p137 = pneg %p131
      %p138 = scmp.eq.s32.totalorder %s21, 27
      %p139 = por %p137, %p138
      %p140 = scmp.ne.s32.totalorder %s132, %s135
      %p141 = scmp.eq.s32.totalorder %s21, 0
      %p142 = por %p140, %p141
      %p143 = scmp.ne.s32.totalorder %s132, %s135
      %p144 = scmp.eq.s32.totalorder %s26, 27
      %p145 = por %p143, %p144
      %p146 = scmp.ne.s32.totalorder %s135, %s136
      %p147 = scmp.eq.s32.totalorder %s26, 0
      %p148 = por %p146, %p147
      %p149 = scmp.ne.s32.totalorder %s135, %s136
      %p150 = scmp.eq.s32.totalorder %s27, 27
      %p151 = por %p149, %p150
      %p153 = scmp.ne.s32.totalorder %s136, %s152
      %p154 = scmp.eq.s32.totalorder %s27, 0
      %p155 = por %p153, %p154
      %s156 = ssub.s32 %s28, %s40
      %p157 = scmp.eq.s32.totalorder %s156, 0
      %s159 = sadd.s32 %s158, 1
      %s160 = scalar_select %p157, %s158, %s159
      %p163 = pneg %p157
      %p164 = scmp.eq.s32.totalorder %s21, 27
      %p165 = por %p163, %p164
      %p166 = scmp.ne.s32.totalorder %s158, %s161
      %p167 = scmp.eq.s32.totalorder %s21, 0
      %p168 = por %p166, %p167
      %p169 = scmp.ne.s32.totalorder %s158, %s161
      %p170 = scmp.eq.s32.totalorder %s26, 27
      %p171 = por %p169, %p170
      %p172 = scmp.ne.s32.totalorder %s161, %s162
      %p173 = scmp.eq.s32.totalorder %s26, 0
      %p174 = por %p172, %p173
      %p175 = scmp.ne.s32.totalorder %s161, %s162
      %p176 = scmp.eq.s32.totalorder %s27, 27
      %p177 = por %p175, %p176
      %p179 = scmp.ne.s32.totalorder %s162, %s178
      %p180 = scmp.eq.s32.totalorder %s27, 0
      %p181 = por %p179, %p180
      %s182 = ssub.s32 %s28, %s40
      %p183 = scmp.eq.s32.totalorder %s182, 0
      %s185 = sadd.s32 %s184, 1
      %s186 = scalar_select %p183, %s184, %s185
      %p189 = pneg %p183
      %p190 = scmp.eq.s32.totalorder %s21, 27
      %p191 = por %p189, %p190
      %p192 = scmp.ne.s32.totalorder %s184, %s187
      %p193 = scmp.eq.s32.totalorder %s21, 0
      %p194 = por %p192, %p193
      %p195 = scmp.ne.s32.totalorder %s184, %s187
      %p196 = scmp.eq.s32.totalorder %s26, 27
      %p197 = por %p195, %p196
      %p198 = scmp.ne.s32.totalorder %s187, %s188
      %p199 = scmp.eq.s32.totalorder %s26, 0
      %p200 = por %p198, %p199
      %p201 = scmp.ne.s32.totalorder %s187, %s188
      %p202 = scmp.eq.s32.totalorder %s27, 27
      %p203 = por %p201, %p202
      %p205 = scmp.ne.s32.totalorder %s188, %s204
      %p206 = scmp.eq.s32.totalorder %s27, 0
      %p207 = por %p205, %p206
      %s209 = sadd.s32 %s208, 1
      %p212 = scmp.eq.s32.totalorder %s21, 27
      %p213 = scmp.ne.s32.totalorder %s208, %s210
      %p214 = scmp.eq.s32.totalorder %s21, 0
      %p215 = por %p213, %p214
      %p216 = scmp.ne.s32.totalorder %s208, %s210
      %p217 = scmp.eq.s32.totalorder %s26, 27
      %p218 = por %p216, %p217
      %p219 = scmp.ne.s32.totalorder %s210, %s211
      %p220 = scmp.eq.s32.totalorder %s26, 0
      %p221 = por %p219, %p220
      %p222 = scmp.ne.s32.totalorder %s210, %s211
      %p223 = scmp.eq.s32.totalorder %s27, 27
      %p224 = por %p222, %p223
      %p226 = scmp.ne.s32.totalorder %s211, %s225
      %p227 = scmp.eq.s32.totalorder %s27, 0
      %p228 = por %p226, %p227
      %p229 = scmp.le.s32.totalorder 1, %s21
      %p230 = scmp.lt.s32.totalorder %s21, 29
      %p231 = pnand %p229, %p230
      %p232 = pneg %p231
      // Predicated region
      $region9: #{deepergcn_forward.1} parent=5 // pred_check
        _
      $region10: #{deepergcn_forward.1} parent=5 // pred_check_branch
        %234 = sbr.rel (%p231) target = $region12
      $region11: #{deepergcn_forward.1} parent=5 // pred_region
        %s235 = ssub.s32 %s21, 1
        // Predicated region
        $region13: #{deepergcn_forward.1} parent=11 // pred_check
          %p236 = pneg %p54
        $region14: #{deepergcn_forward.1} parent=11 // pred_check_branch
          %238 = sbr.rel (%p236) target = $region16
        $region15: #{deepergcn_forward.1} parent=11 // pred_region
          _
        $region16: #{deepergcn_forward.1} parent=11 // pred_fallthru
          _
        // Predicated region
        $region17: #{deepergcn_forward.1} parent=11 // pred_check
          %p239 = pneg %p101
        $region18: #{deepergcn_forward.1} parent=11 // pred_check_branch
          %241 = sbr.rel (%p239) target = $region20
        $region19: #{deepergcn_forward.1} parent=11 // pred_region
          _
        $region20: #{deepergcn_forward.1} parent=11 // pred_fallthru
          _
        // Predicated region
        $region21: #{deepergcn_forward.1} parent=11 // pred_check
          %p242 = pneg %p122
        $region22: #{deepergcn_forward.1} parent=11 // pred_check_branch
          %244 = sbr.rel (%p242) target = $region24
        $region23: #{deepergcn_forward.1} parent=11 // pred_region
          %s246 = ssub.s32 16, 16
          %247 = vsyncadd [#allocation7], %s246
          %s249 = sshll.u32 %s3, 4
          %s250 = int_to_ptr.vmem [resolvable:$true] %s249
          %252 = dma.vmem_to_smem %s250, 16, [#allocation4], [#allocation7]
        $region24: #{deepergcn_forward.1} parent=11 // pred_fallthru
          _
      $region12: #{deepergcn_forward.1} parent=5 // pred_fallthru
        _
      %p253 = scmp.lt.s32.totalorder %s21, 28
      // Predicated region
      $region25: #{deepergcn_forward.1} parent=5 // pred_check
        %p254 = pneg %p253
      $region26: #{deepergcn_forward.1} parent=5 // pred_check_branch
        %256 = sbr.rel (%p254) target = $region28
      $region27: #{deepergcn_forward.1} parent=5 // pred_region
        // Predicated region
        $region29: #{deepergcn_forward.1} parent=27 // pred_check
          %p257 = pneg %p74
        $region30: #{deepergcn_forward.1} parent=27 // pred_check_branch
          %259 = sbr.rel (%p257) target = $region32
        $region31: #{deepergcn_forward.1} parent=27 // pred_region
          %s260 = smul.u32 16, %s29
          %p261 = scmp.lt.s32.totalorder %s260, 31
          %s262 = scalar_select %p261, %s260, 31
          %s263 = smul.addr %s262, 4
          %s264 = scalar_lea.vmem %s1, %s263
          %s265 = smul.u32 16, %s29
        $region32: #{deepergcn_forward.1} parent=27 // pred_fallthru
          _
        // Predicated region
        $region33: #{deepergcn_forward.1} parent=27 // pred_check
          %p266 = pneg %p142
        $region34: #{deepergcn_forward.1} parent=27 // pred_check_branch
          %268 = sbr.rel (%p266) target = $region36
        $region35: #{deepergcn_forward.1} parent=27 // pred_region
          %p269 = scmp.lt.s32.totalorder %s28, 13
          %s270 = scalar_select %p269, %s28, 13
          %s271 = smul.addr %s270, 8
          %s272 = scalar_lea.vmem %s4, %s271
        $region36: #{deepergcn_forward.1} parent=27 // pred_fallthru
          _
        // Predicated region
        $region37: #{deepergcn_forward.1} parent=27 // pred_check
          %p273 = pneg %p168
        $region38: #{deepergcn_forward.1} parent=27 // pred_check_branch
          %275 = sbr.rel (%p273) target = $region40
        $region39: #{deepergcn_forward.1} parent=27 // pred_region
          %s276 = sand.u32 %s158, 1
          %s277 = scalar_lea.sflag [#allocation5], %s276
          %s278 = sand.u32 %s158, 1
          %s279 = smul.addr %s278, 4
          %s280 = scalar_lea.vmem [#allocation8], %s279
          %s282 = ssub.s32 64, 64
          %283 = vsyncadd %s277, %s282
          %s284 = smul.addr %s28, 64
          %s285 = scalar_lea.hbm %s5, %s284
          %s287 = sshll.u32 %s280, 4
          %s288 = int_to_ptr.vmem [resolvable:$true] %s287
          %290 = dma.hbm_to_vmem [thread:$0]  %s285, 64, %s288, %s277
        $region40: #{deepergcn_forward.1} parent=27 // pred_fallthru
          _
        // Predicated region
        $region41: #{deepergcn_forward.1} parent=27 // pred_check
          %p291 = pneg %p194
        $region42: #{deepergcn_forward.1} parent=27 // pred_check_branch
          %293 = sbr.rel (%p291) target = $region44
        $region43: #{deepergcn_forward.1} parent=27 // pred_region
          %s294 = sand.u32 %s184, 1
          %s295 = scalar_lea.sflag [#allocation10], %s294
          %s296 = sand.u32 %s184, 1
          %s297 = smul.addr %s296, 64
          %s298 = scalar_lea.vmem [#allocation9], %s297
          %s300 = ssub.s32 1024, 1024
          %301 = vsyncadd %s295, %s300
          %s302 = smul.addr %s28, 16
          %s303 = smul.addr %s302, 64
          %s304 = scalar_lea.hbm %s6, %s303
          %s305 = sshll.u32 %s298, 4
          %s306 = int_to_ptr.vmem [resolvable:$true] %s305
          %311 = dma.hbm_to_vmem [thread:$0]  %s304, 1024, %s306, %s295, 64, 64, 4
        $region44: #{deepergcn_forward.1} parent=27 // pred_fallthru
          _
      $region28: #{deepergcn_forward.1} parent=5 // pred_fallthru
        _
      %p312 = scmp.le.s32.totalorder 1, %s21
      %p313 = scmp.lt.s32.totalorder %s21, 29
      %p314 = pnand %p312, %p313
      %p315 = pneg %p314
      // Predicated region
      $region45: #{deepergcn_forward.1} parent=5 // pred_check
        _
      $region46: #{deepergcn_forward.1} parent=5 // pred_check_branch
        %317 = sbr.rel (%p314) target = $region48
      $region47: #{deepergcn_forward.1} parent=5 // pred_region
        %s318 = ssub.s32 %s21, 1
        // Predicated region
        $region49: #{deepergcn_forward.1} parent=47 // pred_check
          %p319 = pneg %p122
        $region50: #{deepergcn_forward.1} parent=47 // pred_check_branch
          %321 = sbr.rel (%p319) target = $region52
        $region51: #{deepergcn_forward.1} parent=47 // pred_region
          %322 = dma.done [#allocation7], 16
        $region52: #{deepergcn_forward.1} parent=47 // pred_fallthru
          _
        %s323 = sand.u32 %s161, 1
        %s324 = scalar_lea.sflag [#allocation5], %s323
        %s325 = sand.u32 %s161, 1
        %s326 = smul.addr %s325, 4
        %s327 = scalar_lea.vmem [#allocation8], %s326
        // Predicated region
        $region53: #{deepergcn_forward.1} parent=47 // pred_check
          %p328 = pneg %p174
        $region54: #{deepergcn_forward.1} parent=47 // pred_check_branch
          %330 = sbr.rel (%p328) target = $region56
        $region55: #{deepergcn_forward.1} parent=47 // pred_region
          %331 = dma.done %s324, 64
        $region56: #{deepergcn_forward.1} parent=47 // pred_fallthru
          _
        %s332 = sand.u32 %s187, 1
        %s333 = scalar_lea.sflag [#allocation10], %s332
        %s334 = sand.u32 %s187, 1
        %s335 = smul.addr %s334, 64
        %s336 = scalar_lea.vmem [#allocation9], %s335
        // Predicated region
        $region57: #{deepergcn_forward.1} parent=47 // pred_check
          %p337 = pneg %p200
        $region58: #{deepergcn_forward.1} parent=47 // pred_check_branch
          %339 = sbr.rel (%p337) target = $region60
        $region59: #{deepergcn_forward.1} parent=47 // pred_region
          %340 = dma.done %s333, 1024
        $region60: #{deepergcn_forward.1} parent=47 // pred_fallthru
          _
        %341 = sfence
        %p342 = pneg %p54
        %p343 = pneg %p51
        %s344 = smul.u32 16, %s31
        %p345 = scmp.lt.s32.totalorder %s344, 31
        %s346 = scalar_select %p345, %s344, 31
        %s347 = smul.addr %s346, 4
        %s348 = scalar_lea.vmem %s1, %s347
        %p349 = pneg %p80
        %p350 = pneg %p77
        %p351 = pneg %p101
        %p352 = pneg %p98
        %p353 = pneg %p122
        %p354 = pneg %p119
        %p355 = scmp.lt.s32.totalorder %s30, 13
        %s356 = scalar_select %p355, %s30, 13
        %s357 = smul.addr %s356, 8
        %s358 = scalar_lea.vmem %s4, %s357
        %p359 = pneg %p148
        %p360 = pneg %p145
        %s361 = sand.u32 %s161, 1
        %s362 = scalar_lea.sflag [#allocation5], %s361
        %s363 = sand.u32 %s161, 1
        %s364 = smul.addr %s363, 4
        %s365 = scalar_lea.vmem [#allocation8], %s364
        %p366 = pneg %p174
        %p367 = pneg %p171
        %s368 = sand.u32 %s187, 1
        %s369 = scalar_lea.sflag [#allocation10], %s368
        %s370 = sand.u32 %s187, 1
        %s371 = smul.addr %s370, 64
        %s372 = scalar_lea.vmem [#allocation9], %s371
        %p373 = pneg %p200
        %p374 = pneg %p197
        %p375 = pneg %p221
        %p376 = pneg %p218
        %s377 = smul.u32 16, %s31
        %p378 = scmp.lt.s32.totalorder %s377, 31
        %s379 = scalar_select %p378, %s377, 31
        %s380 = smul.addr %s379, 4
        %s381 = scalar_lea.vmem %s1, %s380
        %s382 = smul.u32 16, %s31
        %p383 = scmp.lt.s32.totalorder %s30, 13
        %s384 = scalar_select %p383, %s30, 13
        %s385 = smul.addr %s384, 8
        %s386 = scalar_lea.vmem %s4, %s385
        %p388 = scmp.eq.s32.totalorder %s30, 0
        %p389 = scmp.eq.s32.totalorder %s31, 0
        %p390 = pnand %p388, %p389
        %p391 = pneg %p390
        // Predicated region
        $region61: #{deepergcn_forward.1} parent=47 // pred_check
          _
        $region62: #{deepergcn_forward.1} parent=47 // pred_check_branch
          %393 = sbr.rel (%p390) target = $region64
        $region63: #{deepergcn_forward.1} parent=47 // pred_region
          %v394 = vld [vmem:[%s0] sm:$0xff]
          %v395 = vld [vmem:[%s0 + $0x8] sm:$0xff]
          %396 = vst [vmem:[#allocation2] sm:$0xff] %v394
          %397 = vst [vmem:[#allocation2 + $0x8] sm:$0xff] %v395
        $region64: #{deepergcn_forward.1} parent=47 // pred_fallthru
          _
        %v398 = vld [vmem:[#allocation2] sm:$0xff]
        %v399 = vld [vmem:[#allocation2 + $0x8] sm:$0xff]
        %v400 = vld [vmem:[%s386] sm:$0xff]
        %v401 = vlaneseq
        %v402 = vshrl.u32 %v401, 7
        %v403 = vsub.s32 0, %v402
        %v404 = vrot.slane %v400, %v403
        %v405 = vmul.f32 %v398, %v404
        %v406 = vmul.f32 %v399, %v404
        %v407 = vlaneseq
        %v408 = vshrl.u32 %v407, 7
        %v409 = vsub.s32 1, %v408
        %v410 = vrot.slane %v400, %v409
        %v411 = vadd.f32 %v405, %v410
        %v412 = vadd.f32 %v406, %v410
        %v413 = vmax.f32 %v411, 0.0
        %v414 = vmax.f32 %v412, 0.0
        %s415 = scalar_select %p388, 1, 0
        %v416 = vstv %s415
        %vm417 = vcmp.eq.s32.totalorder %v416, 1
        %v418 = vsel %vm417, %v398, %v413
        %v419 = vsel %vm417, %v399, %v414
        %v420 = vld [vmem:[%s381] sm:$0xf]
        %v421 = vld [vmem:[%s381 + $0x4] sm:$0xf]
        %v422 = vld [vmem:[%s381 + $0x8] sm:$0xf]
        %v423 = vld [vmem:[%s381 + $0xc] sm:$0xf]
        %v424 = vld [vmem:[%s381 + $0x10] sm:$0xf]
        %v425 = vld [vmem:[%s381 + $0x14] sm:$0xf]
        %v426 = vld [vmem:[%s381 + $0x18] sm:$0xf]
        %v427 = vld [vmem:[%s381 + $0x1c] sm:$0xf]
        %v428 = vld [vmem:[%s381 + $0x20] sm:$0xf]
        %v429 = vld [vmem:[%s381 + $0x24] sm:$0xf]
        %v430 = vld [vmem:[%s381 + $0x28] sm:$0xf]
        %v431 = vld [vmem:[%s381 + $0x2c] sm:$0xf]
        %v432 = vld [vmem:[%s381 + $0x30] sm:$0xf]
        %v433 = vld [vmem:[%s381 + $0x34] sm:$0xf]
        %v434 = vld [vmem:[%s381 + $0x38] sm:$0xf]
        %v435 = vld [vmem:[%s381 + $0x3c] sm:$0xf]
        %v436 = vld [vmem:[%s327] sm:$0xf]
        %v453 = vunpack.c.l.b16 %v420
        %v454 = vunpack.c.l.b16 %v421
        %v455 = vunpack.c.l.b16 %v422
        %v456 = vunpack.c.l.b16 %v423
        %v457 = vunpack.c.l.b16 %v424
        %v458 = vunpack.c.l.b16 %v425
        %v459 = vunpack.c.l.b16 %v426
        %v460 = vunpack.c.l.b16 %v427
        %v461 = vunpack.c.l.b16 %v428
        %v462 = vunpack.c.l.b16 %v429
        %v463 = vunpack.c.l.b16 %v430
        %v464 = vunpack.c.l.b16 %v431
        %v465 = vunpack.c.l.b16 %v432
        %v466 = vunpack.c.l.b16 %v433
        %v467 = vunpack.c.l.b16 %v434
        %v468 = vunpack.c.l.b16 %v435
        %v469 = vpack.c.b16 %v454, %v453
        %v470 = vpack.c.b16 %v456, %v455
        %v471 = vpack.c.b16 %v458, %v457
        %v472 = vpack.c.b16 %v460, %v459
        %v473 = vpack.c.b16 %v462, %v461
        %v474 = vpack.c.b16 %v464, %v463
        %v475 = vpack.c.b16 %v466, %v465
        %v476 = vpack.c.b16 %v468, %v467
        %vm477 = vcmask 64512
        %v479 = vsel %vm477, %v469, 0
        %v482 = vsel %vm477, %v470, 0
        %v485 = vsel %vm477, %v471, 0
        %v488 = vsel %vm477, %v472, 0
        %v491 = vsel %vm477, %v473, 0
        %v494 = vsel %vm477, %v474, 0
        %v497 = vsel %vm477, %v475, 0
        %v500 = vsel %vm477, %v476, 0
        %vm502 = vcmask 1043456
        %v504 = vsel %vm502, %v436, 0
        %506 = vmatprep.subr.bf16.mxu0 0
        %507 = vmatpush1.bf16.msra.mxu0 %v504
        %508 = vmatprep.subr.bf16.mxu0 0
        %509 = vmatpush1.bf16.msra.mxu0 0
        %510 = vmatprep.subr.bf16.mxu0 0
        %511 = vmatpush1.bf16.msra.mxu0 0
        %512 = vmatprep.subr.bf16.mxu0 0
        %513 = vmatpush1.bf16.msra.mxu0 0
        %514 = vmatprep.subr.bf16.mxu0 0
        %515 = vmatpush1.bf16.msra.mxu0 0
        %516 = vmatprep.subr.bf16.mxu0 0
        %517 = vmatpush1.bf16.msra.mxu0 0
        %518 = vmatprep.subr.bf16.mxu0 0
        %519 = vmatpush1.bf16.msra.mxu0 0
        %520 = vmatprep.subr.bf16.mxu0 0
        %521 = vmatpush1.bf16.msra.mxu0 0
        %522 = vmatprep.subr.bf16.mxu0 0
        %523 = vmatpush1.bf16.msra.mxu0 0
        %524 = vmatprep.subr.bf16.mxu0 0
        %525 = vmatpush1.bf16.msra.mxu0 0
        %526 = vmatprep.subr.bf16.mxu0 0
        %527 = vmatpush1.bf16.msra.mxu0 0
        %528 = vmatprep.subr.bf16.mxu0 0
        %529 = vmatpush1.bf16.msra.mxu0 0
        %530 = vmatprep.subr.bf16.mxu0 0
        %531 = vmatpush1.bf16.msra.mxu0 0
        %532 = vmatprep.subr.bf16.mxu0 0
        %533 = vmatpush1.bf16.msra.mxu0 0
        %534 = vmatprep.subr.bf16.mxu0 0
        %535 = vmatpush1.bf16.msra.mxu0 0
        %536 = vmatprep.subr.bf16.mxu0 0
        %537 = vmatpush1.bf16.msra.mxu0 0
        %538 = vmatprep.mubr.bf16.mxu0 0
        %539 = vmatmul.mubr.bf16.gmra.mrb[0].mxu0 %v479
        %v540 = vpop.f32.mrb[0].mxu0
        %v541 = vadd.f32 0.0, %v540
        %v542 = vpop.f32.mrb[0].mxu0
        %v543 = vpop.f32.mrb[0].mxu0
        %v544 = vadd.f32 0.0, %v543
        %v545 = vpop.f32.mrb[0].mxu0
        %546 = vmatprep.mubr.bf16.mxu0 0
        %547 = vmatmul.mubr.bf16.gmra.mrb[0].mxu0 %v482
        %v548 = vpop.f32.mrb[0].mxu0
        %v549 = vadd.f32 0.0, %v548
        %v550 = vpop.f32.mrb[0].mxu0
        %v551 = vpop.f32.mrb[0].mxu0
        %v552 = vadd.f32 0.0, %v551
        %v553 = vpop.f32.mrb[0].mxu0
        %554 = vmatprep.mubr.bf16.mxu0 0
        %555 = vmatmul.mubr.bf16.gmra.mrb[0].mxu0 %v485
        %v556 = vpop.f32.mrb[0].mxu0
        %v557 = vadd.f32 0.0, %v556
        %v558 = vpop.f32.mrb[0].mxu0
        %v559 = vpop.f32.mrb[0].mxu0
        %v560 = vadd.f32 0.0, %v559
        %v561 = vpop.f32.mrb[0].mxu0
        %562 = vmatprep.mubr.bf16.mxu0 0
        %563 = vmatmul.mubr.bf16.gmra.mrb[0].mxu0 %v488
        %v564 = vpop.f32.mrb[0].mxu0
        %v565 = vadd.f32 0.0, %v564
        %v566 = vpop.f32.mrb[0].mxu0
        %v567 = vpop.f32.mrb[0].mxu0
        %v568 = vadd.f32 0.0, %v567
        %v569 = vpop.f32.mrb[0].mxu0
        %570 = vmatprep.mubr.bf16.mxu0 0
        %571 = vmatmul.mubr.bf16.gmra.mrb[0].mxu0 %v491
        %v572 = vpop.f32.mrb[0].mxu0
        %v573 = vadd.f32 0.0, %v572
        %v574 = vpop.f32.mrb[0].mxu0
        %v575 = vpop.f32.mrb[0].mxu0
        %v576 = vadd.f32 0.0, %v575
        %v577 = vpop.f32.mrb[0].mxu0
        %578 = vmatprep.mubr.bf16.mxu0 0
        %579 = vmatmul.mubr.bf16.gmra.mrb[0].mxu0 %v494
        %v580 = vpop.f32.mrb[0].mxu0
        %v581 = vadd.f32 0.0, %v580
        %v582 = vpop.f32.mrb[0].mxu0
        %v583 = vpop.f32.mrb[0].mxu0
        %v584 = vadd.f32 0.0, %v583
        %v585 = vpop.f32.mrb[0].mxu0
        %586 = vmatprep.mubr.bf16.mxu0 0
        %587 = vmatmul.mubr.bf16.gmra.mrb[0].mxu0 %v497
        %v588 = vpop.f32.mrb[0].mxu0
        %v589 = vadd.f32 0.0, %v588
        %v590 = vpop.f32.mrb[0].mxu0
        %v591 = vpop.f32.mrb[0].mxu0
        %v592 = vadd.f32 0.0, %v591
        %v593 = vpop.f32.mrb[0].mxu0
        %594 = vmatprep.mubr.bf16.mxu0 0
        %595 = vmatmul.mubr.bf16.gmra.mrb[0].mxu0 %v500
        %v596 = vpop.f32.mrb[0].mxu0
        %v597 = vadd.f32 0.0, %v596
        %v598 = vpop.f32.mrb[0].mxu0
        %v599 = vpop.f32.mrb[0].mxu0
        %v600 = vadd.f32 0.0, %v599
        %v601 = vpop.f32.mrb[0].mxu0
        %602 = vdwg.mxu0
        %v603 = vunpack.c.l.bf16 %v420
        %v604 = vunpack.c.l.bf16 %v421
        %v605 = vunpack.c.l.bf16 %v422
        %v606 = vunpack.c.l.bf16 %v423
        %v607 = vunpack.c.l.bf16 %v424
        %v608 = vunpack.c.l.bf16 %v425
        %v609 = vunpack.c.l.bf16 %v426
        %v610 = vunpack.c.l.bf16 %v427
        %v611 = vunpack.c.l.bf16 %v428
        %v612 = vunpack.c.l.bf16 %v429
        %v613 = vunpack.c.l.bf16 %v430
        %v614 = vunpack.c.l.bf16 %v431
        %v615 = vunpack.c.l.bf16 %v432
        %v616 = vunpack.c.l.bf16 %v433
        %v617 = vunpack.c.l.bf16 %v434
        %v618 = vunpack.c.l.bf16 %v435
        %v619 = vmul.f32 %v603, -1e+30
        %v620 = vmul.f32 %v604, -1e+30
        %v621 = vmul.f32 %v605, -1e+30
        %v622 = vmul.f32 %v606, -1e+30
        %v623 = vmul.f32 %v607, -1e+30
        %v624 = vmul.f32 %v608, -1e+30
        %v625 = vmul.f32 %v609, -1e+30
        %v626 = vmul.f32 %v610, -1e+30
        %v627 = vmul.f32 %v611, -1e+30
        %v628 = vmul.f32 %v612, -1e+30
        %v629 = vmul.f32 %v613, -1e+30
        %v630 = vmul.f32 %v614, -1e+30
        %v631 = vmul.f32 %v615, -1e+30
        %v632 = vmul.f32 %v616, -1e+30
        %v633 = vmul.f32 %v617, -1e+30
        %v634 = vmul.f32 %v618, -1e+30
        %s635 = sld [smem:[#allocation4 + %s30]]
        %v636 = vadd.f32 %v418, %v541
        %v637 = vadd.f32 %v419, %v544
        %v638 = vadd.f32 %v418, %v549
        %v639 = vadd.f32 %v419, %v552
        %v640 = vadd.f32 %v418, %v557
        %v641 = vadd.f32 %v419, %v560
        %v642 = vadd.f32 %v418, %v565
        %v643 = vadd.f32 %v419, %v568
        %v644 = vadd.f32 %v418, %v573
        %v645 = vadd.f32 %v419, %v576
        %v646 = vadd.f32 %v418, %v581
        %v647 = vadd.f32 %v419, %v584
        %v648 = vadd.f32 %v418, %v589
        %v649 = vadd.f32 %v419, %v592
        %v650 = vadd.f32 %v418, %v597
        %v651 = vadd.f32 %v419, %v600
        %v652 = vmax.f32 %v636, 0.0
        %v653 = vmax.f32 %v637, 0.0
        %v654 = vmax.f32 %v638, 0.0
        %v655 = vmax.f32 %v639, 0.0
        %v656 = vmax.f32 %v640, 0.0
        %v657 = vmax.f32 %v641, 0.0
        %v658 = vmax.f32 %v642, 0.0
        %v659 = vmax.f32 %v643, 0.0
        %v660 = vmax.f32 %v644, 0.0
        %v661 = vmax.f32 %v645, 0.0
        %v662 = vmax.f32 %v646, 0.0
        %v663 = vmax.f32 %v647, 0.0
        %v664 = vmax.f32 %v648, 0.0
        %v665 = vmax.f32 %v649, 0.0
        %v666 = vmax.f32 %v650, 0.0
        %v667 = vmax.f32 %v651, 0.0
        %v668 = vadd.f32 %v652, 1e-07
        %v669 = vadd.f32 %v653, 1e-07
        %v670 = vadd.f32 %v654, 1e-07
        %v671 = vadd.f32 %v655, 1e-07
        %v672 = vadd.f32 %v656, 1e-07
        %v673 = vadd.f32 %v657, 1e-07
        %v674 = vadd.f32 %v658, 1e-07
        %v675 = vadd.f32 %v659, 1e-07
        %v676 = vadd.f32 %v660, 1e-07
        %v677 = vadd.f32 %v661, 1e-07
        %v678 = vadd.f32 %v662, 1e-07
        %v679 = vadd.f32 %v663, 1e-07
        %v680 = vadd.f32 %v664, 1e-07
        %v681 = vadd.f32 %v665, 1e-07
        %v682 = vadd.f32 %v666, 1e-07
        %v683 = vadd.f32 %v667, 1e-07
        %v684 = vstv %s635
        %v685 = vmul.f32 %v668, %v684
        %v686 = vmul.f32 %v669, %v684
        %v687 = vmul.f32 %v670, %v684
        %v688 = vmul.f32 %v671, %v684
        %v689 = vmul.f32 %v672, %v684
        %v690 = vmul.f32 %v673, %v684
        %v691 = vmul.f32 %v674, %v684
        %v692 = vmul.f32 %v675, %v684
        %v693 = vmul.f32 %v676, %v684
        %v694 = vmul.f32 %v677, %v684
        %v695 = vmul.f32 %v678, %v684
        %v696 = vmul.f32 %v679, %v684
        %v697 = vmul.f32 %v680, %v684
        %v698 = vmul.f32 %v681, %v684
        %v699 = vmul.f32 %v682, %v684
        %v700 = vmul.f32 %v683, %v684
        %702 = vset.pattern.permute.xlu0 4
        %703 = vperm.xlu0 %702, %v619
        %v704 = vpop.permute.xlu0 %703
        %707 = vset.pattern.permute.xlu0 4
        %708 = vperm.xlu0 %707, %v620
        %v709 = vpop.permute.xlu0 %708
        %712 = vset.pattern.permute.xlu0 4
        %713 = vperm.xlu0 %712, %v621
        %v714 = vpop.permute.xlu0 %713
        %717 = vset.pattern.permute.xlu0 4
        %718 = vperm.xlu0 %717, %v622
        %v719 = vpop.permute.xlu0 %718
        %722 = vset.pattern.permute.xlu0 4
        %723 = vperm.xlu0 %722, %v623
        %v724 = vpop.permute.xlu0 %723
        %727 = vset.pattern.permute.xlu0 4
        %728 = vperm.xlu0 %727, %v624
        %v729 = vpop.permute.xlu0 %728
        %732 = vset.pattern.permute.xlu0 4
        %733 = vperm.xlu0 %732, %v625
        %v734 = vpop.permute.xlu0 %733
        %737 = vset.pattern.permute.xlu0 4
        %738 = vperm.xlu0 %737, %v626
        %v739 = vpop.permute.xlu0 %738
        %742 = vset.pattern.permute.xlu0 4
        %743 = vperm.xlu0 %742, %v627
        %v744 = vpop.permute.xlu0 %743
        %747 = vset.pattern.permute.xlu0 4
        %748 = vperm.xlu0 %747, %v628
        %v749 = vpop.permute.xlu0 %748
        %752 = vset.pattern.permute.xlu0 4
        %753 = vperm.xlu0 %752, %v629
        %v754 = vpop.permute.xlu0 %753
        %757 = vset.pattern.permute.xlu0 4
        %758 = vperm.xlu0 %757, %v630
        %v759 = vpop.permute.xlu0 %758
        %762 = vset.pattern.permute.xlu0 4
        %763 = vperm.xlu0 %762, %v631
        %v764 = vpop.permute.xlu0 %763
        %767 = vset.pattern.permute.xlu0 4
        %768 = vperm.xlu0 %767, %v632
        %v769 = vpop.permute.xlu0 %768
        %772 = vset.pattern.permute.xlu0 4
        %773 = vperm.xlu0 %772, %v633
        %v774 = vpop.permute.xlu0 %773
        %777 = vset.pattern.permute.xlu0 4
        %778 = vperm.xlu0 %777, %v634
        %v779 = vpop.permute.xlu0 %778
        %v781 = vadd.f32 %v685, %v704
        %v782 = vadd.f32 %v686, %v709
        %v783 = vadd.f32 %v687, %v714
        %v784 = vadd.f32 %v688, %v719
        %v785 = vadd.f32 %v689, %v724
        %v786 = vadd.f32 %v690, %v729
        %v787 = vadd.f32 %v691, %v734
        %v788 = vadd.f32 %v692, %v739
        %v789 = vadd.f32 %v693, %v744
        %v790 = vadd.f32 %v694, %v749
        %v791 = vadd.f32 %v695, %v754
        %v792 = vadd.f32 %v696, %v759
        %v793 = vadd.f32 %v697, %v764
        %v794 = vadd.f32 %v698, %v769
        %v795 = vadd.f32 %v699, %v774
        %v796 = vadd.f32 %v700, %v779
        %v797 = vmax.f32 %v781, %v782
        %v798 = vrot.slane %v797, 4
        %v799 = vmax.f32 %v797, %v798
        %v800 = vrot.slane %v799, 2
        %v801 = vmax.f32 %v799, %v800
        %v802 = vrot.slane %v801, 1
        %v803 = vmax.f32 %v801, %v802
        %v804 = vmax.f32 %v783, %v784
        %v805 = vrot.slane %v804, 4
        %v806 = vmax.f32 %v804, %v805
        %v807 = vrot.slane %v806, 2
        %v808 = vmax.f32 %v806, %v807
        %v809 = vrot.slane %v808, 1
        %v810 = vmax.f32 %v808, %v809
        %v811 = vmax.f32 %v785, %v786
        %v812 = vrot.slane %v811, 4
        %v813 = vmax.f32 %v811, %v812
        %v814 = vrot.slane %v813, 2
        %v815 = vmax.f32 %v813, %v814
        %v816 = vrot.slane %v815, 1
        %v817 = vmax.f32 %v815, %v816
        %v818 = vmax.f32 %v787, %v788
        %v819 = vrot.slane %v818, 4
        %v820 = vmax.f32 %v818, %v819
        %v821 = vrot.slane %v820, 2
        %v822 = vmax.f32 %v820, %v821
        %v823 = vrot.slane %v822, 1
        %v824 = vmax.f32 %v822, %v823
        %v825 = vmax.f32 %v789, %v790
        %v826 = vrot.slane %v825, 4
        %v827 = vmax.f32 %v825, %v826
        %v828 = vrot.slane %v827, 2
        %v829 = vmax.f32 %v827, %v828
        %v830 = vrot.slane %v829, 1
        %v831 = vmax.f32 %v829, %v830
        %v832 = vmax.f32 %v791, %v792
        %v833 = vrot.slane %v832, 4
        %v834 = vmax.f32 %v832, %v833
        %v835 = vrot.slane %v834, 2
        %v836 = vmax.f32 %v834, %v835
        %v837 = vrot.slane %v836, 1
        %v838 = vmax.f32 %v836, %v837
        %v839 = vmax.f32 %v793, %v794
        %v840 = vrot.slane %v839, 4
        %v841 = vmax.f32 %v839, %v840
        %v842 = vrot.slane %v841, 2
        %v843 = vmax.f32 %v841, %v842
        %v844 = vrot.slane %v843, 1
        %v845 = vmax.f32 %v843, %v844
        %v846 = vmax.f32 %v795, %v796
        %v847 = vrot.slane %v846, 4
        %v848 = vmax.f32 %v846, %v847
        %v849 = vrot.slane %v848, 2
        %v850 = vmax.f32 %v848, %v849
        %v851 = vrot.slane %v850, 1
        %v852 = vmax.f32 %v850, %v851
        %v853 = vsub.f32 %v781, %v803
        %v854 = vsub.f32 %v782, %v803
        %v855 = vsub.f32 %v783, %v810
        %v856 = vsub.f32 %v784, %v810
        %v857 = vsub.f32 %v785, %v817
        %v858 = vsub.f32 %v786, %v817
        %v859 = vsub.f32 %v787, %v824
        %v860 = vsub.f32 %v788, %v824
        %v861 = vsub.f32 %v789, %v831
        %v862 = vsub.f32 %v790, %v831
        %v863 = vsub.f32 %v791, %v838
        %v864 = vsub.f32 %v792, %v838
        %v865 = vsub.f32 %v793, %v845
        %v866 = vsub.f32 %v794, %v845
        %v867 = vsub.f32 %v795, %v852
        %v868 = vsub.f32 %v796, %v852
        %v869 = vmul.f32 %v853, 1.442695
        %v870 = vpow.pop %v869
        %v871 = vmul.f32 %v854, 1.442695
        %v872 = vpow.pop %v871
        %v873 = vmul.f32 %v855, 1.442695
        %v874 = vpow.pop %v873
        %v875 = vmul.f32 %v856, 1.442695
        %v876 = vpow.pop %v875
        %v877 = vmul.f32 %v857, 1.442695
        %v878 = vpow.pop %v877
        %v879 = vmul.f32 %v858, 1.442695
        %v880 = vpow.pop %v879
        %v881 = vmul.f32 %v859, 1.442695
        %v882 = vpow.pop %v881
        %v883 = vmul.f32 %v860, 1.442695
        %v884 = vpow.pop %v883
        %v885 = vmul.f32 %v861, 1.442695
        %v886 = vpow.pop %v885
        %v887 = vmul.f32 %v862, 1.442695
        %v888 = vpow.pop %v887
        %v889 = vmul.f32 %v863, 1.442695
        %v890 = vpow.pop %v889
        %v891 = vmul.f32 %v864, 1.442695
        %v892 = vpow.pop %v891
        %v893 = vmul.f32 %v865, 1.442695
        %v894 = vpow.pop %v893
        %v895 = vmul.f32 %v866, 1.442695
        %v896 = vpow.pop %v895
        %v897 = vmul.f32 %v867, 1.442695
        %v898 = vpow.pop %v897
        %v899 = vmul.f32 %v868, 1.442695
        %v900 = vpow.pop %v899
        %v901 = vadd.f32 %v870, %v872
        %v902 = vrot.slane %v901, 4
        %v903 = vadd.f32 %v901, %v902
        %v904 = vrot.slane %v903, 2
        %v905 = vadd.f32 %v903, %v904
        %v906 = vrot.slane %v905, 1
        %v907 = vadd.f32 %v905, %v906
        %v908 = vadd.f32 %v874, %v876
        %v909 = vrot.slane %v908, 4
        %v910 = vadd.f32 %v908, %v909
        %v911 = vrot.slane %v910, 2
        %v912 = vadd.f32 %v910, %v911
        %v913 = vrot.slane %v912, 1
        %v914 = vadd.f32 %v912, %v913
        %v915 = vadd.f32 %v878, %v880
        %v916 = vrot.slane %v915, 4
        %v917 = vadd.f32 %v915, %v916
        %v918 = vrot.slane %v917, 2
        %v919 = vadd.f32 %v917, %v918
        %v920 = vrot.slane %v919, 1
        %v921 = vadd.f32 %v919, %v920
        %v922 = vadd.f32 %v882, %v884
        %v923 = vrot.slane %v922, 4
        %v924 = vadd.f32 %v922, %v923
        %v925 = vrot.slane %v924, 2
        %v926 = vadd.f32 %v924, %v925
        %v927 = vrot.slane %v926, 1
        %v928 = vadd.f32 %v926, %v927
        %v929 = vadd.f32 %v886, %v888
        %v930 = vrot.slane %v929, 4
        %v931 = vadd.f32 %v929, %v930
        %v932 = vrot.slane %v931, 2
        %v933 = vadd.f32 %v931, %v932
        %v934 = vrot.slane %v933, 1
        %v935 = vadd.f32 %v933, %v934
        %v936 = vadd.f32 %v890, %v892
        %v937 = vrot.slane %v936, 4
        %v938 = vadd.f32 %v936, %v937
        %v939 = vrot.slane %v938, 2
        %v940 = vadd.f32 %v938, %v939
        %v941 = vrot.slane %v940, 1
        %v942 = vadd.f32 %v940, %v941
        %v943 = vadd.f32 %v894, %v896
        %v944 = vrot.slane %v943, 4
        %v945 = vadd.f32 %v943, %v944
        %v946 = vrot.slane %v945, 2
        %v947 = vadd.f32 %v945, %v946
        %v948 = vrot.slane %v947, 1
        %v949 = vadd.f32 %v947, %v948
        %v950 = vadd.f32 %v898, %v900
        %v951 = vrot.slane %v950, 4
        %v952 = vadd.f32 %v950, %v951
        %v953 = vrot.slane %v952, 2
        %v954 = vadd.f32 %v952, %v953
        %v955 = vrot.slane %v954, 1
        %v956 = vadd.f32 %v954, %v955
        %v957 = vadd.f32 %v907, 1e-16
        %v958 = vadd.f32 %v914, 1e-16
        %v959 = vadd.f32 %v921, 1e-16
        %v960 = vadd.f32 %v928, 1e-16
        %v961 = vadd.f32 %v935, 1e-16
        %v962 = vadd.f32 %v942, 1e-16
        %v963 = vadd.f32 %v949, 1e-16
        %v964 = vadd.f32 %v956, 1e-16
        %v965 = vmul.f32 %v870, %v781
        %v966 = vmul.f32 %v872, %v782
        %v967 = vmul.f32 %v874, %v783
        %v968 = vmul.f32 %v876, %v784
        %v969 = vmul.f32 %v878, %v785
        %v970 = vmul.f32 %v880, %v786
        %v971 = vmul.f32 %v882, %v787
        %v972 = vmul.f32 %v884, %v788
        %v973 = vmul.f32 %v886, %v789
        %v974 = vmul.f32 %v888, %v790
        %v975 = vmul.f32 %v890, %v791
        %v976 = vmul.f32 %v892, %v792
        %v977 = vmul.f32 %v894, %v793
        %v978 = vmul.f32 %v896, %v794
        %v979 = vmul.f32 %v898, %v795
        %v980 = vmul.f32 %v900, %v796
        %v981 = vadd.f32 %v965, %v966
        %v982 = vrot.slane %v981, 4
        %v983 = vadd.f32 %v981, %v982
        %v984 = vrot.slane %v983, 2
        %v985 = vadd.f32 %v983, %v984
        %v986 = vrot.slane %v985, 1
        %v987 = vadd.f32 %v985, %v986
        %v988 = vadd.f32 %v967, %v968
        %v989 = vrot.slane %v988, 4
        %v990 = vadd.f32 %v988, %v989
        %v991 = vrot.slane %v990, 2
        %v992 = vadd.f32 %v990, %v991
        %v993 = vrot.slane %v992, 1
        %v994 = vadd.f32 %v992, %v993
        %v995 = vadd.f32 %v969, %v970
        %v996 = vrot.slane %v995, 4
        %v997 = vadd.f32 %v995, %v996
        %v998 = vrot.slane %v997, 2
        %v999 = vadd.f32 %v997, %v998
        %v1000 = vrot.slane %v999, 1
        %v1001 = vadd.f32 %v999, %v1000
        %v1002 = vadd.f32 %v971, %v972
        %v1003 = vrot.slane %v1002, 4
        %v1004 = vadd.f32 %v1002, %v1003
        %v1005 = vrot.slane %v1004, 2
        %v1006 = vadd.f32 %v1004, %v1005
        %v1007 = vrot.slane %v1006, 1
        %v1008 = vadd.f32 %v1006, %v1007
        %v1009 = vadd.f32 %v973, %v974
        %v1010 = vrot.slane %v1009, 4
        %v1011 = vadd.f32 %v1009, %v1010
        %v1012 = vrot.slane %v1011, 2
        %v1013 = vadd.f32 %v1011, %v1012
        %v1014 = vrot.slane %v1013, 1
        %v1015 = vadd.f32 %v1013, %v1014
        %v1016 = vadd.f32 %v975, %v976
        %v1017 = vrot.slane %v1016, 4
        %v1018 = vadd.f32 %v1016, %v1017
        %v1019 = vrot.slane %v1018, 2
        %v1020 = vadd.f32 %v1018, %v1019
        %v1021 = vrot.slane %v1020, 1
        %v1022 = vadd.f32 %v1020, %v1021
        %v1023 = vadd.f32 %v977, %v978
        %v1024 = vrot.slane %v1023, 4
        %v1025 = vadd.f32 %v1023, %v1024
        %v1026 = vrot.slane %v1025, 2
        %v1027 = vadd.f32 %v1025, %v1026
        %v1028 = vrot.slane %v1027, 1
        %v1029 = vadd.f32 %v1027, %v1028
        %v1030 = vadd.f32 %v979, %v980
        %v1031 = vrot.slane %v1030, 4
        %v1032 = vadd.f32 %v1030, %v1031
        %v1033 = vrot.slane %v1032, 2
        %v1034 = vadd.f32 %v1032, %v1033
        %v1035 = vrot.slane %v1034, 1
        %v1036 = vadd.f32 %v1034, %v1035
        %v1037 = vmul.f32 %v957, %v684
        %v1038 = vmul.f32 %v958, %v684
        %v1039 = vmul.f32 %v959, %v684
        %v1040 = vmul.f32 %v960, %v684
        %v1041 = vmul.f32 %v961, %v684
        %v1042 = vmul.f32 %v962, %v684
        %v1043 = vmul.f32 %v963, %v684
        %v1044 = vmul.f32 %v964, %v684
        %v1045 = vrcp.pop %v1037
        %v1046 = vmul.f32 %v987, %v1045
        %v1047 = vrcp.pop %v1038
        %v1048 = vmul.f32 %v994, %v1047
        %v1049 = vrcp.pop %v1039
        %v1050 = vmul.f32 %v1001, %v1049
        %v1051 = vrcp.pop %v1040
        %v1052 = vmul.f32 %v1008, %v1051
        %v1053 = vrcp.pop %v1041
        %v1054 = vmul.f32 %v1015, %v1053
        %v1055 = vrcp.pop %v1042
        %v1056 = vmul.f32 %v1022, %v1055
        %v1057 = vrcp.pop %v1043
        %v1058 = vmul.f32 %v1029, %v1057
        %v1059 = vrcp.pop %v1044
        %v1060 = vmul.f32 %v1036, %v1059
        %s1061 = smul.u32 %s31, 8
        %vm1070 = vcmask 1041409
        %v1071 = vsel %vm1070, %v1048, %v1046
        %vm1072 = vcmask 1042434
        %v1073 = vsel %vm1072, %v1050, %v1071
        %vm1074 = vcmask 1043459
        %v1075 = vsel %vm1074, %v1052, %v1073
        %vm1076 = vcmask 1044484
        %v1077 = vsel %vm1076, %v1054, %v1075
        %vm1078 = vcmask 1045509
        %v1079 = vsel %vm1078, %v1056, %v1077
        %vm1080 = vcmask 1046534
        %v1081 = vsel %vm1080, %v1058, %v1079
        %vm1082 = vcmask 1047559
        %v1083 = vsel %vm1082, %v1060, %v1081
        %s1085 = scalar_lea.vmem [#allocation3], %s1061
        %1086 = vst [vmem:[%s1085] sm:$0xff] %v1083
        %p1087 = scmp.eq.s32.totalorder %s31, 1
        // Predicated region
        $region65: #{deepergcn_forward.1} parent=47 // pred_check
          %p1088 = pneg %p1087
        $region66: #{deepergcn_forward.1} parent=47 // pred_check_branch
          %1090 = sbr.rel (%p1088) target = $region68
        $region67: #{deepergcn_forward.1} parent=47 // pred_region
          %v1091 = vld [vmem:[#allocation3] sm:$0xff]
          %v1092 = vld [vmem:[#allocation3 + $0x8] sm:$0xff]
          %v1093 = vadd.f32 %v1091, %v418
          %v1094 = vadd.f32 %v1092, %v419
          %v1095 = vpack.c.bf16 %v1094, %v1093
          %v1096 = vld [vmem:[%s336] sm:$0xf]
          %v1097 = vld [vmem:[%s336 + $0x4] sm:$0xf]
          %v1098 = vld [vmem:[%s336 + $0x8] sm:$0xf]
          %v1099 = vld [vmem:[%s336 + $0xc] sm:$0xf]
          %v1100 = vld [vmem:[%s336 + $0x10] sm:$0xf]
          %v1101 = vld [vmem:[%s336 + $0x14] sm:$0xf]
          %v1102 = vld [vmem:[%s336 + $0x18] sm:$0xf]
          %v1103 = vld [vmem:[%s336 + $0x1c] sm:$0xf]
          %v1104 = vld [vmem:[%s336 + $0x20] sm:$0xf]
          %v1105 = vld [vmem:[%s336 + $0x24] sm:$0xf]
          %v1106 = vld [vmem:[%s336 + $0x28] sm:$0xf]
          %v1107 = vld [vmem:[%s336 + $0x2c] sm:$0xf]
          %v1108 = vld [vmem:[%s336 + $0x30] sm:$0xf]
          %v1109 = vld [vmem:[%s336 + $0x34] sm:$0xf]
          %v1110 = vld [vmem:[%s336 + $0x38] sm:$0xf]
          %v1111 = vld [vmem:[%s336 + $0x3c] sm:$0xf]
          %v1112 = vlaneseq
          %v1113 = vshrl.u32 %v1112, 7
          %v1114 = vsub.s32 2, %v1113
          %v1115 = vrot.slane %v400, %v1114
          %v1132 = vunpack.c.l.b16 %v1096
          %v1133 = vunpack.c.l.b16 %v1097
          %v1134 = vunpack.c.l.b16 %v1098
          %v1135 = vunpack.c.l.b16 %v1099
          %v1136 = vunpack.c.l.b16 %v1100
          %v1137 = vunpack.c.l.b16 %v1101
          %v1138 = vunpack.c.l.b16 %v1102
          %v1139 = vunpack.c.l.b16 %v1103
          %v1140 = vunpack.c.l.b16 %v1104
          %v1141 = vunpack.c.l.b16 %v1105
          %v1142 = vunpack.c.l.b16 %v1106
          %v1143 = vunpack.c.l.b16 %v1107
          %v1144 = vunpack.c.l.b16 %v1108
          %v1145 = vunpack.c.l.b16 %v1109
          %v1146 = vunpack.c.l.b16 %v1110
          %v1147 = vunpack.c.l.b16 %v1111
          %v1148 = vpack.c.b16 %v1133, %v1132
          %v1149 = vpack.c.b16 %v1135, %v1134
          %v1150 = vpack.c.b16 %v1137, %v1136
          %v1151 = vpack.c.b16 %v1139, %v1138
          %v1152 = vpack.c.b16 %v1141, %v1140
          %v1153 = vpack.c.b16 %v1143, %v1142
          %v1154 = vpack.c.b16 %v1145, %v1144
          %v1155 = vpack.c.b16 %v1147, %v1146
          %1164 = vmatprep.subr.bf16.mxu0 0
          %1165 = vmatpush1.bf16.msra.mxu0 %v1148
          %1166 = vmatprep.subr.bf16.mxu0 0
          %1167 = vmatpush1.bf16.msra.mxu0 %v1149
          %1168 = vmatprep.subr.bf16.mxu0 0
          %1169 = vmatpush1.bf16.msra.mxu0 %v1150
          %1170 = vmatprep.subr.bf16.mxu0 0
          %1171 = vmatpush1.bf16.msra.mxu0 %v1151
          %1172 = vmatprep.subr.bf16.mxu0 0
          %1173 = vmatpush1.bf16.msra.mxu0 %v1152
          %1174 = vmatprep.subr.bf16.mxu0 0
          %1175 = vmatpush1.bf16.msra.mxu0 %v1153
          %1176 = vmatprep.subr.bf16.mxu0 0
          %1177 = vmatpush1.bf16.msra.mxu0 %v1154
          %1178 = vmatprep.subr.bf16.mxu0 0
          %1179 = vmatpush1.bf16.msra.mxu0 %v1155
          %1180 = vmatprep.subr.bf16.mxu0 0
          %1181 = vmatpush1.bf16.msra.mxu0 0
          %1182 = vmatprep.subr.bf16.mxu0 0
          %1183 = vmatpush1.bf16.msra.mxu0 0
          %1184 = vmatprep.subr.bf16.mxu0 0
          %1185 = vmatpush1.bf16.msra.mxu0 0
          %1186 = vmatprep.subr.bf16.mxu0 0
          %1187 = vmatpush1.bf16.msra.mxu0 0
          %1188 = vmatprep.subr.bf16.mxu0 0
          %1189 = vmatpush1.bf16.msra.mxu0 0
          %1190 = vmatprep.subr.bf16.mxu0 0
          %1191 = vmatpush1.bf16.msra.mxu0 0
          %1192 = vmatprep.subr.bf16.mxu0 0
          %1193 = vmatpush1.bf16.msra.mxu0 0
          %1194 = vmatprep.subr.bf16.mxu0 0
          %1195 = vmatpush1.bf16.msra.mxu0 0
          %1196 = vmatprep.mubr.bf16.mxu0 0
          %1197 = vmatmul.mubr.bf16.gmra.mrb[0].mxu0 %v1095
          %v1198 = vpop.f32.mrb[0].mxu0
          %v1199 = vadd.f32 %v1115, %v1198
          %v1200 = vpop.f32.mrb[0].mxu0
          %v1201 = vpop.f32.mrb[0].mxu0
          %v1202 = vadd.f32 %v1115, %v1201
          %v1203 = vpop.f32.mrb[0].mxu0
          %1204 = vdwg.mxu0
          %v1205 = vadd.f32 %v1199, %v398
          %v1206 = vadd.f32 %v1202, %v399
          %v1207 = vsel %vm417, %v1199, %v1205
          %v1208 = vsel %vm417, %v1202, %v1206
          %1209 = vst [vmem:[#allocation2] sm:$0xff] %v1207
          %1210 = vst [vmem:[#allocation2 + $0x8] sm:$0xff] %v1208
        $region68: #{deepergcn_forward.1} parent=47 // pred_fallthru
          _
        %p1211 = scmp.eq.s32.totalorder %s30, 13
        %p1212 = pnand %p1211, %p1087
        %p1213 = pneg %p1212
        // Predicated region
        $region69: #{deepergcn_forward.1} parent=47 // pred_check
          _
        $region70: #{deepergcn_forward.1} parent=47 // pred_check_branch
          %1215 = sbr.rel (%p1212) target = $region72
        $region71: #{deepergcn_forward.1} parent=47 // pred_region
          %v1216 = vld [vmem:[#allocation2] sm:$0xff]
          %v1217 = vld [vmem:[#allocation2 + $0x8] sm:$0xff]
          %v1218 = vlaneseq
          %v1219 = vshrl.u32 %v1218, 7
          %v1220 = vsub.s32 3, %v1219
          %v1221 = vrot.slane %v400, %v1220
          %v1222 = vmul.f32 %v1216, %v1221
          %v1223 = vmul.f32 %v1217, %v1221
          %v1224 = vlaneseq
          %v1225 = vshrl.u32 %v1224, 7
          %v1226 = vsub.s32 4, %v1225
          %v1227 = vrot.slane %v400, %v1226
          %v1228 = vadd.f32 %v1222, %v1227
          %v1229 = vadd.f32 %v1223, %v1227
          %v1230 = vld [vmem:[%s2] sm:$0x1]
          %v1231 = vpack.c.bf16 %v1229, %v1228
          %vm1232 = vcmask 130048
          %v1234 = vsel %vm1232, %v1230, 0
          %1236 = vmatprep.subr.bf16.mxu0 0
          %1237 = vmatpush1.bf16.msra.mxu0 %v1231
          %1238 = vmatprep.subr.bf16.mxu0 0
          %1239 = vmatpush1.bf16.msra.mxu0 0
          %1240 = vmatprep.subr.bf16.mxu0 0
          %1241 = vmatpush1.bf16.msra.mxu0 0
          %1242 = vmatprep.subr.bf16.mxu0 0
          %1243 = vmatpush1.bf16.msra.mxu0 0
          %1244 = vmatprep.subr.bf16.mxu0 0
          %1245 = vmatpush1.bf16.msra.mxu0 0
          %1246 = vmatprep.subr.bf16.mxu0 0
          %1247 = vmatpush1.bf16.msra.mxu0 0
          %1248 = vmatprep.subr.bf16.mxu0 0
          %1249 = vmatpush1.bf16.msra.mxu0 0
          %1250 = vmatprep.subr.bf16.mxu0 0
          %1251 = vmatpush1.bf16.msra.mxu0 0
          %1252 = vmatprep.subr.bf16.mxu0 0
          %1253 = vmatpush1.bf16.msra.mxu0 0
          %1254 = vmatprep.subr.bf16.mxu0 0
          %1255 = vmatpush1.bf16.msra.mxu0 0
          %1256 = vmatprep.subr.bf16.mxu0 0
          %1257 = vmatpush1.bf16.msra.mxu0 0
          %1258 = vmatprep.subr.bf16.mxu0 0
          %1259 = vmatpush1.bf16.msra.mxu0 0
          %1260 = vmatprep.subr.bf16.mxu0 0
          %1261 = vmatpush1.bf16.msra.mxu0 0
          %1262 = vmatprep.subr.bf16.mxu0 0
          %1263 = vmatpush1.bf16.msra.mxu0 0
          %1264 = vmatprep.subr.bf16.mxu0 0
          %1265 = vmatpush1.bf16.msra.mxu0 0
          %1266 = vmatprep.subr.bf16.mxu0 0
          %1267 = vmatpush1.bf16.msra.mxu0 0
          %1268 = vmatprep.mubr.bf16.mxu0 0
          %1269 = vmatmul.mubr.bf16.gmra.mrb[0].mxu0 %v1234
          %v1270 = vpop.f32.mrb[0].mxu0
          %v1271 = vadd.f32 0.0, %v1270
          %v1272 = vpop.f32.mrb[0].mxu0
          %v1273 = vpop.f32.mrb[0].mxu0
          %v1274 = vpop.f32.mrb[0].mxu0
          %1275 = vdwg.mxu0
          %1276 = vst [vmem:[#allocation11] sm:$0x3] %v1271
        $region72: #{deepergcn_forward.1} parent=47 // pred_fallthru
          _
        // Predicated region
        $region73: #{deepergcn_forward.1} parent=47 // pred_check
          %p1277 = pneg %p218
        $region74: #{deepergcn_forward.1} parent=47 // pred_check_branch
          %1279 = sbr.rel (%p1277) target = $region76
        $region75: #{deepergcn_forward.1} parent=47 // pred_region
          %s1281 = ssub.s32 32, 32
          %1282 = vsyncadd [#allocation6], %s1281
          %s1284 = sshll.u32 [#allocation11], 4
          %s1285 = int_to_ptr.vmem [resolvable:$true] %s1284
          %1287 = dma.vmem_to_hbm [thread:$0]  %s1285, 32, %s7, [#allocation6]
        $region76: #{deepergcn_forward.1} parent=47 // pred_fallthru
          _
        // Predicated region
        $region77: #{deepergcn_forward.1} parent=47 // pred_check
          %p1288 = pneg %p218
        $region78: #{deepergcn_forward.1} parent=47 // pred_check_branch
          %1290 = sbr.rel (%p1288) target = $region80
        $region79: #{deepergcn_forward.1} parent=47 // pred_region
          %1291 = dma.done [#allocation6], 32
        $region80: #{deepergcn_forward.1} parent=47 // pred_fallthru
          _
      $region48: #{deepergcn_forward.1} parent=5 // pred_fallthru
        _
      %p1292 = scmp.le.s32.totalorder 2, %s21
      // Predicated region
      $region81: #{deepergcn_forward.1} parent=5 // pred_check
        %p1293 = pneg %p1292
      $region82: #{deepergcn_forward.1} parent=5 // pred_check_branch
        %1295 = sbr.rel (%p1293) target = $region84
      $region83: #{deepergcn_forward.1} parent=5 // pred_region
        %s1296 = ssub.s32 %s21, 2
      $region84: #{deepergcn_forward.1} parent=5 // pred_fallthru
        _
    $region6: #{deepergcn_forward.1} parent=1 // loop_footer
      %s25 = sadd.s32 1, %s21
    $region7: #{deepergcn_forward.1} parent=1 // loop_footer_branch
      %20 = sbr.rel target = $region3
    $region8: #{deepergcn_forward.1} parent=1 // loop_exit
      _
    %1297 = vsyncpa [#allocation5], 1
    %s1298 = scalar_lea.sflag [#allocation5], 1
    %1299 = vsyncpa %s1298, 1
    %1300 = vsyncpa [#allocation10], 1
    %s1301 = scalar_lea.sflag [#allocation10], 1
    %1302 = vsyncpa %s1301, 1
    %1303 = vsyncpa [#allocation6], 1
    %s1304 = scalar_lea.sflag [#allocation6], 1
    %1305 = vsyncpa %s1304, 1
    %1306 = vsyncpa [#allocation7], 1
    %s1307 = scalar_lea.sflag [#allocation7], 1
    %1308 = vsyncpa %s1307, 1

</llo_original>
